<compile_context>
chip_gen: v7x
topology: tpu7x:2x2x1
jax: 0.10.0
libtpu: 0.0.40
codegen_flags: <defaults>
</compile_context>

<pallas_src>
import functools

import jax
import jax.numpy as jnp
import numpy as np
from jax.experimental import pallas as pl
from jax.experimental.pallas import tpu as pltpu


def _pair_loss_kernel(dmu_ref, binv_ref, logterm_ref, w_ref, loss_ref, *, diag_const):
    """Accumulate sum_{pairs in tile} w / max(d_mu^T B d_mu / 8 + logterm, 1e-3)."""
    step = pl.program_id(0)

    @pl.when(step == 0)
    def _init():
        # Diagonal of d_B: d_mu == 0 and the log-det term is ~0, so every diagonal
        # entry clamps to 0.001 and contributes exactly 1/0.001 (folded as a constant).
        loss_ref[0, 0] = jnp.float32(diag_const)

    dmu = dmu_ref[...]                                     # (TP, D)   VMEM
    binv = binv_ref[...]                                   # (TP, D, D) VMEM
    # Quadratic form d_mu^T B d_mu, vectorized over the whole pair tile:
    # a single VPU broadcast-multiply + XLU reductions, no per-pair MXU matmuls.
    # (At D=8 the tile is a handful of vregs; flattening to (TP, D*D) for full lane
    # density would need an in-kernel relayout for no measurable gain at this size.)
    t = jnp.sum(dmu[:, :, None] * binv, axis=1)            # (TP, D)
    quad = jnp.sum(t * dmu, axis=1, keepdims=True)         # (TP, 1)

    d_b = jnp.float32(0.125) * quad + logterm_ref[...]     # (TP, 1)
    d_b = jnp.maximum(d_b, jnp.float32(0.001))
    # NOTE: the reference's `if d_B[i,j] > 3: d_B[i,j] > 3` is a no-op bug; faithfully
    # reproduced by omission.  Exact divide (no approx reciprocal) — see header note.
    partial = jnp.sum(w_ref[...] / d_b)                    # scalar: weight 2 per i<j pair
    loss_ref[0, 0] = loss_ref[0, 0] + partial              # SMEM scalar accumulator


@jax.jit
def overlapping_loss(mu, sigma_inv):
    """Pallas implementation of OverlappingLoss.forward."""
    clusters, dim = mu.shape
    mu32 = mu.astype(jnp.float32)
    s32 = sigma_inv.astype(jnp.float32)

    # Per-cluster precision Gram matrices; a single XLA einsum that fuses with the
    # inverse below (the old standalone Pallas MXU kernel had a K=8 contraction and
    # threw away every off-diagonal block).
    prec = jnp.einsum("cik,cjk->cij", s32, s32)             # (C, D, D)

    # TODO(synk): the batched DxD inverses / slogdets (torch.inverse / torch.det) have
    # no clean Pallas TPU equivalent; they stay in XLA, but only over the C clusters
    # and the C(C-1)/2 unique i<j pairs (d_B is symmetric), never the full C^2.
    sigma = jnp.linalg.inv(prec)                            # (C, D, D)
    logdet_sigma = -jnp.linalg.slogdet(prec)[1]             # (C,)  logdet(inv(A)) = -logdet(A)

    iu, ju = np.triu_indices(clusters, k=1)                 # static host-side indices
    n_pairs = int(iu.size)

    sigma_pair = 0.5 * (sigma[iu] + sigma[ju])              # (P, D, D)
    binv = jnp.linalg.inv(sigma_pair)                       # (P, D, D)
    logdet_pair = jnp.linalg.slogdet(sigma_pair)[1]         # (P,)
    logterm = 0.5 * (logdet_pair
                     - 0.5 * (logdet_sigma[iu] + logdet_sigma[ju]))   # (P,)
    dmu = mu32[iu] - mu32[ju]                               # (P, D)

    # Pad the pair axis to a sublane-aligned tile and grid over pair tiles so binv
    # never has to sit in VMEM in one shot as C grows; padded rows get weight 0.
    tile_p = 8
    pad = (-n_pairs) % tile_p
    p_tot = n_pairs + pad
    dmu = jnp.pad(dmu, ((0, pad), (0, 0)))
    binv = jnp.pad(binv, ((0, pad), (0, 0), (0, 0)))
    logterm = jnp.pad(logterm, (0, pad)).reshape(p_tot, 1).astype(jnp.float32)
    weights = jnp.pad(jnp.full((n_pairs,), 2.0, jnp.float32),
                      (0, pad)).reshape(p_tot, 1)

    kernel = functools.partial(_pair_loss_kernel,
                               diag_const=float(clusters) / 0.001)

    loss = pl.pallas_call(
        kernel,
        grid=(p_tot // tile_p,),
        in_specs=[
            pl.BlockSpec((tile_p, dim), lambda t: (t, 0)),
            pl.BlockSpec((tile_p, dim, dim), lambda t: (t, 0, 0)),
            pl.BlockSpec((tile_p, 1), lambda t: (t, 0)),
            pl.BlockSpec((tile_p, 1), lambda t: (t, 0)),
        ],
        out_specs=pl.BlockSpec(memory_space=pltpu.MemorySpace.SMEM),
        out_shape=jax.ShapeDtypeStruct((1, 1), jnp.float32),
        compiler_params=pltpu.CompilerParams(
            # The grid axis carries the scalar accumulator -> "arbitrary".
            dimension_semantics=("arbitrary",)),
    )(dmu, binv.astype(jnp.float32), logterm, weights)

    return loss[0, 0]


def _overlapping_loss_ref(mu, sigma_inv):
    """Pure-JAX reference mirroring the PyTorch forward (full C x C)."""
    sigma = jnp.linalg.inv(jnp.matmul(sigma_inv, jnp.swapaxes(sigma_inv, 1, 2)))
    d_mu = mu[:, None, :] - mu[None, :, :]                  # (C, C, D)
    sigma_ij = 0.5 * (sigma[:, None] + sigma[None, :])      # (C, C, D, D)
    quad = jnp.einsum("ijd,ijde,ije->ij", d_mu, jnp.linalg.inv(sigma_ij), d_mu)
    det_ij = jnp.linalg.det(sigma_ij)
    det_c = jnp.linalg.det(sigma)
    d_b = quad / 8.0 + 0.5 * jnp.log(
        det_ij / jnp.sqrt(det_c[:, None] * det_c[None, :]))
    d_b = jnp.maximum(d_b, 0.001)   # upper clamp in the torch code is a no-op
    return jnp.sum(1.0 / d_b)


if __name__ == "__main__":
    key = jax.random.PRNGKey(0)
    kmu, ks = jax.random.split(key)
    clusters, dim = 4, 8
    mu = jax.random.normal(kmu, (clusters, dim), dtype=jnp.float32)
    # well-conditioned precision factor (identity + noise), consistent with the module
    sigma_inv = (0.3 * jax.random.normal(ks, (clusters, dim, dim), dtype=jnp.float32)
                 + jnp.eye(dim, dtype=jnp.float32))

    loss = overlapping_loss(mu, sigma_inv)
    jax.block_until_ready(loss)

    ref = _overlapping_loss_ref(mu, sigma_inv)
    jax.block_until_ready(ref)
    assert jnp.allclose(loss, ref, rtol=5e-3, atol=5e-3), (loss, ref)

    print("KERNEL_OK")
</pallas_src>

<mosaic_0001>
module attributes {stable_mosaic.version = 11 : i64} {
  func.func @_pair_loss_kernel(%arg0: i32, %arg1: memref<8x8xf32, #tpu.memory_space<vmem>>, %arg2: memref<8x8x8xf32, #tpu.memory_space<vmem>>, %arg3: memref<8x1xf32, #tpu.memory_space<vmem>>, %arg4: memref<8x1xf32, #tpu.memory_space<vmem>>, %arg5: memref<1x1xf32, #tpu.memory_space<smem>>) attributes {dimension_semantics = [#tpu.dimension_semantics<arbitrary>], iteration_bounds = array<i64: 1>, scalar_prefetch = 0 : i64, scratch_operands = 0 : i64, tpu.core_type = #tpu.core_type<tc>, window_params = [{transform_indices = @transform_0, window_bounds = array<i64: 8, 8>}, {transform_indices = @transform_1, window_bounds = array<i64: 8, 8, 8>}, {transform_indices = @transform_2, window_bounds = array<i64: 8, 1>}, {transform_indices = @transform_3, window_bounds = array<i64: 8, 1>}, {transform_indices = @transform_4, window_bounds = array<i64: 1, 1>}]} {
    %c0_i32 = arith.constant 0 : i32
    %0 = arith.cmpi eq, %arg0, %c0_i32 : i32
    %1 = arith.extui %0 : i1 to i32
    %c0_i32_0 = arith.constant 0 : i32
    %2 = arith.cmpi ne, %1, %c0_i32_0 : i32
    scf.if %2 {
      %cst_17 = arith.constant 4.000000e+03 : f32
      %c0_18 = arith.constant 0 : index
      %c0_19 = arith.constant 0 : index
      %27 = memref.load %arg5[%c0_18, %c0_19] : memref<1x1xf32, #tpu.memory_space<smem>>
      memref.store %cst_17, %arg5[%c0_18, %c0_19] : memref<1x1xf32, #tpu.memory_space<smem>>
    } else {
    }
    %c0 = arith.constant 0 : index
    %c0_1 = arith.constant 0 : index
    %3 = vector.load %arg1[%c0, %c0_1] : memref<8x8xf32, #tpu.memory_space<vmem>>, vector<8x8xf32>
    %c0_2 = arith.constant 0 : index
    %c0_3 = arith.constant 0 : index
    %c0_4 = arith.constant 0 : index
    %4 = vector.load %arg2[%c0_2, %c0_3, %c0_4] : memref<8x8x8xf32, #tpu.memory_space<vmem>>, vector<8x8x8xf32>
    %5 = vector.shape_cast %3 : vector<8x8xf32> to vector<8x8x1xf32>
    %6 = vector.broadcast %5 : vector<8x8x1xf32> to vector<8x8x8xf32>
    %7 = arith.mulf %6, %4 : vector<8x8x8xf32>
    %cst = arith.constant dense<0.000000e+00> : vector<8x8xf32>
    %8 = vector.multi_reduction <add>, %7, %cst [1] : vector<8x8x8xf32> to vector<8x8xf32>
    %9 = arith.mulf %8, %3 : vector<8x8xf32>
    %cst_5 = arith.constant dense<0.000000e+00> : vector<8xf32>
    %10 = vector.multi_reduction <add>, %9, %cst_5 [1] : vector<8x8xf32> to vector<8xf32>
    %11 = vector.shape_cast %10 : vector<8xf32> to vector<8x1xf32>
    %cst_6 = arith.constant 1.250000e-01 : f32
    %12 = vector.broadcast %cst_6 : f32 to vector<8x1xf32>
    %13 = arith.mulf %12, %11 : vector<8x1xf32>
    %c0_7 = arith.constant 0 : index
    %c0_8 = arith.constant 0 : index
    %14 = vector.load %arg3[%c0_7, %c0_8] : memref<8x1xf32, #tpu.memory_space<vmem>>, vector<8x1xf32>
    %15 = arith.addf %13, %14 : vector<8x1xf32>
    %cst_9 = arith.constant 1.000000e-03 : f32
    %16 = vector.broadcast %cst_9 : f32 to vector<8x1xf32>
    %17 = arith.maximumf %15, %16 : vector<8x1xf32>
    %c0_10 = arith.constant 0 : index
    %c0_11 = arith.constant 0 : index
    %18 = vector.load %arg4[%c0_10, %c0_11] : memref<8x1xf32, #tpu.memory_space<vmem>>, vector<8x1xf32>
    %19 = arith.divf %18, %17 : vector<8x1xf32>
    %20 = vector.shape_cast %19 : vector<8x1xf32> to vector<1x8x1xf32>
    %cst_12 = arith.constant dense<0.000000e+00> : vector<1xf32>
    %21 = vector.multi_reduction <add>, %20, %cst_12 [1, 2] : vector<1x8x1xf32> to vector<1xf32>
    %22 = vector.shape_cast %21 : vector<1xf32> to vector<1x1x1xf32>
    %23 = vector.extract %22[0, 0, 0] : f32 from vector<1x1x1xf32>
    %c0_13 = arith.constant 0 : index
    %c0_14 = arith.constant 0 : index
    %24 = memref.load %arg5[%c0_13, %c0_14] : memref<1x1xf32, #tpu.memory_space<smem>>
    %25 = arith.addf %24, %23 : f32
    %c0_15 = arith.constant 0 : index
    %c0_16 = arith.constant 0 : index
    %26 = memref.load %arg5[%c0_15, %c0_16] : memref<1x1xf32, #tpu.memory_space<smem>>
    memref.store %25, %arg5[%c0_15, %c0_16] : memref<1x1xf32, #tpu.memory_space<smem>>
    return
  }
  func.func @transform_0(%arg0: i32) -> (i32, i32) {
    %c0_i32 = arith.constant 0 : i32
    %c0_i32_0 = arith.constant 0 : i32
    return %arg0, %c0_i32 : i32, i32
  }
  func.func @transform_1(%arg0: i32) -> (i32, i32, i32) {
    %c0_i32 = arith.constant 0 : i32
    %c0_i32_0 = arith.constant 0 : i32
    %c0_i32_1 = arith.constant 0 : i32
    return %arg0, %c0_i32, %c0_i32_0 : i32, i32, i32
  }
  func.func @transform_2(%arg0: i32) -> (i32, i32) {
    %c0_i32 = arith.constant 0 : i32
    %c0_i32_0 = arith.constant 0 : i32
    return %arg0, %c0_i32 : i32, i32
  }
  func.func @transform_3(%arg0: i32) -> (i32, i32) {
    %c0_i32 = arith.constant 0 : i32
    %c0_i32_0 = arith.constant 0 : i32
    return %arg0, %c0_i32 : i32, i32
  }
  func.func @transform_4(%arg0: i32) -> (i32, i32) {
    %c0_i32 = arith.constant 0 : i32
    %c0_i32_0 = arith.constant 0 : i32
    %c0_i32_1 = arith.constant 0 : i32
    return %c0_i32, %c0_i32_0 : i32, i32
  }
}

</mosaic_0001>

<llo_original>
// kernel: custom-call.34
$region0: #{custom-call.34}
  %s0 = inlined_call_operand.vmem [shape: f32[4,8,8], index: 0, kind: input, shape index: {}]
  %s1 = inlined_call_operand.vmem [shape: f32[4,8,8], index: 1, kind: output, shape index: {0}]
  %s2 = inlined_call_operand.hbm [shape: s32[4,8], index: 2, kind: output, shape index: {1}]
  %s3 = inlined_call_operand.vmem [shape: s32[4,8], index: 3, kind: output, shape index: {2}]
  %4 = xla_tuple %s1, %s2, %s3
  $region1: #{custom-call.34} parent=0
    #allocation0 [shape = 'u8[8192]{0}', space=vmem, size = 0x2000, scoped, tag = 'operand span for operand 0']
    #allocation1 [shape = 'u8[8192]{0}', space=vmem, size = 0x2000, scoped, tag = 'operand span for operand 1']
    #allocation2 [shape = 'u8[4096]{0}', space=vmem, size = 0x1000, scoped, tag = 'operand span for operand 2']
    #allocation3 [shape = 'u8[4096]{0}', space=vmem, size = 0x1000, scoped, tag = 'packed  for operand 2']
    #allocation4 [shape = 's32[2]{0}', space=sflag, size = 0x8, scoped, tag = 'scoped memory for custom-call.34']
    #allocation5 [shape = 'u8[4096]{0}', space=vmem, size = 0x1000, scoped, tag = 'operand span for operand 3']
    #allocation6 [shape = 'u8[4096]{0}', space=vmem, size = 0x1000, scoped, tag = 'packed  for operand 3']
    %5 = vsyncpa [#allocation4], 0
    %s6 = scalar_lea.sflag [#allocation4], 1
    %7 = vsyncpa %s6, 0
    loop: start=0, step=1, limit=6
    $region2: #{custom-call.34} parent=1 // loop_pre_header
      _
    $region3: #{custom-call.34} parent=1 // loop_header
      %s9 = sphi 0, %s13
      %p10 = scmp.ge.s32.totalorder %s9, 6
      %s21 = sphi 0, %s23
      %s24 = sphi 0, %s21
      %s25 = sphi 0, %s24
      %s41 = sphi 0, %s25
      %s49 = sphi 0, %s51
      %s52 = sphi 0, %s49
      %s53 = sphi 0, %s52
      %s69 = sphi 0, %s53
    $region4: #{custom-call.34} parent=1 // loop_header_branch
      %12 = sbr.rel (%p10) target = $region8
    $region5: #{custom-call.34} parent=1 // loop_body
      %s14 = ssub.s32 %s9, 1
      %s15 = ssub.s32 %s9, 2
      %s16 = sadd.s32 %s9, 1
      %s17 = sshrl.u32 %s9, 3
      %s18 = sshrl.u32 %s16, 3
      %s19 = ssub.s32 %s17, %s18
      %p20 = scmp.eq.s32.totalorder %s19, 0
      %s22 = sadd.s32 %s21, 1
      %s23 = scalar_select %p20, %s21, %s22
      %p26 = pneg %p20
      %p27 = scmp.eq.s32.totalorder %s9, 3
      %p28 = por %p26, %p27
      %p29 = scmp.ne.s32.totalorder %s21, %s24
      %p30 = scmp.eq.s32.totalorder %s9, 0
      %p31 = por %p29, %p30
      %p32 = scmp.ne.s32.totalorder %s21, %s24
      %p33 = scmp.eq.s32.totalorder %s14, 3
      %p34 = por %p32, %p33
      %p35 = scmp.ne.s32.totalorder %s24, %s25
      %p36 = scmp.eq.s32.totalorder %s14, 0
      %p37 = por %p35, %p36
      %p38 = scmp.ne.s32.totalorder %s24, %s25
      %p39 = scmp.eq.s32.totalorder %s15, 3
      %p40 = por %p38, %p39
      %p42 = scmp.ne.s32.totalorder %s25, %s41
      %p43 = scmp.eq.s32.totalorder %s15, 0
      %p44 = por %p42, %p43
      %s45 = sshrl.u32 %s9, 3
      %s46 = sshrl.u32 %s16, 3
      %s47 = ssub.s32 %s45, %s46
      %p48 = scmp.eq.s32.totalorder %s47, 0
      %s50 = sadd.s32 %s49, 1
      %s51 = scalar_select %p48, %s49, %s50
      %p54 = pneg %p48
      %p55 = scmp.eq.s32.totalorder %s9, 3
      %p56 = por %p54, %p55
      %p57 = scmp.ne.s32.totalorder %s49, %s52
      %p58 = scmp.eq.s32.totalorder %s9, 0
      %p59 = por %p57, %p58
      %p60 = scmp.ne.s32.totalorder %s49, %s52
      %p61 = scmp.eq.s32.totalorder %s14, 3
      %p62 = por %p60, %p61
      %p63 = scmp.ne.s32.totalorder %s52, %s53
      %p64 = scmp.eq.s32.totalorder %s14, 0
      %p65 = por %p63, %p64
      %p66 = scmp.ne.s32.totalorder %s52, %s53
      %p67 = scmp.eq.s32.totalorder %s15, 3
      %p68 = por %p66, %p67
      %p70 = scmp.ne.s32.totalorder %s53, %s69
      %p71 = scmp.eq.s32.totalorder %s15, 0
      %p72 = por %p70, %p71
      %p73 = scmp.le.s32.totalorder 1, %s9
      %p74 = scmp.lt.s32.totalorder %s9, 5
      %p75 = pnand %p73, %p74
      %p76 = pneg %p75
      // Predicated region
      $region9: #{custom-call.34} parent=5 // pred_check
        _
      $region10: #{custom-call.34} parent=5 // pred_check_branch
        %78 = sbr.rel (%p75) target = $region12
      $region11: #{custom-call.34} parent=5 // pred_region
        %s79 = ssub.s32 %s9, 1
      $region12: #{custom-call.34} parent=5 // pred_fallthru
        _
      %p80 = scmp.lt.s32.totalorder %s9, 4
      // Predicated region
      $region13: #{custom-call.34} parent=5 // pred_check
        %p81 = pneg %p80
      $region14: #{custom-call.34} parent=5 // pred_check_branch
        %83 = sbr.rel (%p81) target = $region16
      $region15: #{custom-call.34} parent=5 // pred_region
        %s84 = sand.u32 %s9, 1
        %s85 = sand.u32 %s9, 1
        %s86 = smul.addr %s85, 8
        %s87 = scalar_lea.vmem [#allocation0], %s86
        %s88 = smul.addr %s9, 8
        %s89 = scalar_lea.vmem %s0, %s88
        // Predicated region
        $region17: #{custom-call.34} parent=15 // pred_check
          _
        $region18: #{custom-call.34} parent=15 // pred_check_branch
          %91 = sbr.rel (0) target = $region20
        $region19: #{custom-call.34} parent=15 // pred_region
          // Predicated region
          $region21: #{custom-call.34} parent=19 // pred_check
            _
          $region22: #{custom-call.34} parent=19 // pred_check_branch
            %93 = sbr.rel (0) target = $region24
          $region23: #{custom-call.34} parent=19 // pred_region
            // Predicated region
            $region36: #{custom-call.34} parent=23 // pred_check
              _
            $region37: #{custom-call.34} parent=23 // pred_check_branch
              %108 = sbr.rel (0) target = $region39
            $region38: #{custom-call.34} parent=23 // pred_region
              loop: start=0, step=1, limit=1
              $region40: #{custom-call.34} parent=38 // loop_pre_header
                _
              $region41: #{custom-call.34} parent=38 // loop_header
                %s110 = sphi 0, %s114
                %p111 = scmp.ge.s32.totalorder %s110, 1
                %s115 = sphi %s89, %s89
                %s116 = sphi %s87, %s87
              $region42: #{custom-call.34} parent=38 // loop_header_branch
                %113 = sbr.rel (%p111) target = $region46
              $region43: #{custom-call.34} parent=38 // loop_body
                %v117 = vld [vmem:[%s115] sm:$0xff]
                %118 = vst [vmem:[%s116] sm:$0xff] %v117
              $region44: #{custom-call.34} parent=38 // loop_footer
                %s114 = sadd.s32 1, %s110
              $region45: #{custom-call.34} parent=38 // loop_footer_branch
                %109 = sbr.rel target = $region41
              $region46: #{custom-call.34} parent=38 // loop_exit
                _
            $region39: #{custom-call.34} parent=23 // pred_fallthru
              _
            // Predicated region
            $region47: #{custom-call.34} parent=23 // pred_check
              _
            $region48: #{custom-call.34} parent=23 // pred_check_branch
              %120 = sbr.rel target = $region50
            $region49: #{custom-call.34} parent=23 // pred_region
              _
            $region50: #{custom-call.34} parent=23 // pred_fallthru
              _
          $region24: #{custom-call.34} parent=19 // pred_fallthru
            _
          // Predicated region
          $region25: #{custom-call.34} parent=19 // pred_check
            _
          $region26: #{custom-call.34} parent=19 // pred_check_branch
            %95 = sbr.rel target = $region28
          $region27: #{custom-call.34} parent=19 // pred_region
            loop: start=0, step=1, limit=1
            $region29: #{custom-call.34} parent=27 // loop_pre_header
              _
            $region30: #{custom-call.34} parent=27 // loop_header
              %s98 = sphi 0, %s102
              %p99 = scmp.ge.s32.totalorder %s98, 1
              %s103 = sphi %s89, %s89
              %s104 = sphi %s87, %s87
            $region31: #{custom-call.34} parent=27 // loop_header_branch
              %101 = sbr.rel (%p99) target = $region35
            $region32: #{custom-call.34} parent=27 // loop_body
              %v105 = vld [vmem:[%s103] sm:$0xff]
              %106 = vst [vmem:[%s104] sm:$0xff] %v105
            $region33: #{custom-call.34} parent=27 // loop_footer
              %s102 = sadd.s32 1, %s98
            $region34: #{custom-call.34} parent=27 // loop_footer_branch
              %97 = sbr.rel target = $region30
            $region35: #{custom-call.34} parent=27 // loop_exit
              _
          $region28: #{custom-call.34} parent=19 // pred_fallthru
            _
        $region20: #{custom-call.34} parent=15 // pred_fallthru
          _
        %121 = vnop
      $region16: #{custom-call.34} parent=5 // pred_fallthru
        _
      %p122 = scmp.le.s32.totalorder 1, %s9
      %p123 = scmp.lt.s32.totalorder %s9, 5
      %p124 = pnand %p122, %p123
      %p125 = pneg %p124
      // Predicated region
      $region51: #{custom-call.34} parent=5 // pred_check
        _
      $region52: #{custom-call.34} parent=5 // pred_check_branch
        %127 = sbr.rel (%p124) target = $region54
      $region53: #{custom-call.34} parent=5 // pred_region
        #allocation7 [shape = 's32[8,128]{1,0}', space=vmem, size = 0x1000, scoped, tag = 'scratch for permutations']
        %s128 = ssub.s32 %s9, 1
        %s129 = sand.u32 %s14, 1
        %s130 = sand.u32 %s14, 1
        %s131 = smul.addr %s130, 8
        %s132 = scalar_lea.vmem [#allocation0], %s131
        %s133 = sand.u32 %s14, 1
        %s134 = sand.u32 %s14, 1
        %s135 = smul.addr %s134, 8
        %s136 = scalar_lea.vmem [#allocation0], %s135
        %s137 = sand.u32 %s14, 1
        %s138 = sand.u32 %s14, 1
        %s139 = smul.addr %s138, 8
        %s140 = scalar_lea.vmem [#allocation1], %s139
        %p141 = pneg %p37
        %p142 = pneg %p34
        %s143 = sand.u32 %s24, 1
        %s144 = scalar_lea.sflag [#allocation4], %s143
        %s145 = sand.u32 %s24, 1
        %s146 = smul.addr %s145, 4
        %s147 = scalar_lea.vmem [#allocation3], %s146
        %p148 = pneg %p65
        %p149 = pneg %p62
        %s150 = sand.u32 %s52, 1
        %s151 = sand.u32 %s52, 1
        %s152 = smul.addr %s151, 4
        %s153 = scalar_lea.vmem [#allocation6], %s152
        %s154 = sshrl.u32 %s14, 3
        %s155 = sshrl.u32 %s14, 3
        %v156 = vld [vmem:[%s132] sm:$0xff]
        %157 = vst [vmem:[%s140] sm:$0xff] %v156
        %s158 = sand.u32 %s14, 7
        %s159 = scalar_lea.vmem [#allocation2], %s158
        %s160 = sand.u32 %s14, 7
        %s161 = scalar_lea.vmem [#allocation5], %s160
        %162 = vst [vmem:[%s159] sm:$0x1] 0
        %v163 = vlaneseq
        %v164 = vshrl.u32 %v163, 7
        %v165 = vmov %v164
        %167 = vst [vmem:[#allocation7] sm:$0xff] %v165
        loop: start=0, step=1, limit=8
        $region56: #{custom-call.34} parent=53 // loop_pre_header
          _
        $region57: #{custom-call.34} parent=53 // loop_header
          %s169 = sphi 0, %s173
          %p170 = scmp.ge.s32.totalorder %s169, 8
        $region58: #{custom-call.34} parent=53 // loop_header_branch
          %172 = sbr.rel (%p170) target = $region62
        $region59: #{custom-call.34} parent=53 // loop_body
          %v174 = vstv %s169
          %v175 = vlaneseq
          %v176 = vshrl.u32 %v175, 7
          %v177 = vmov %v176
          %v178 = vld [vmem:[%s140] sm:$0xff]
          %v179 = vand.u32 2147483647, %v178
          %v181 = vstv %s169
          %vm182 = vcmp.ge.s32.totalorder %v177, %v181
          %vm183 = vcmp.lt.s32.totalorder %v177, 8
          %vm184 = vmand %vm182, %vm183
          %vm185 = vcmp.lt.f32.partialorder -inf, %v179
          %vm186 = vmand %vm184, %vm185
          %v187 = vsel %vm186, %v177, %v174
          %v188 = vsel %vm186, %v179, -inf
          %v189 = vrot.slane %v188, 1
          %v190 = vrot.slane %v187, 1
          %vm191 = vcmp.ge.f32.partialorder %v189, %v188
          %v192 = vsel %vm191, %v189, %v188
          %v193 = vsel %vm191, %v190, %v187
          %v194 = vrot.slane %v189, 1
          %v195 = vrot.slane %v190, 1
          %vm196 = vcmp.ge.f32.partialorder %v194, %v192
          %v197 = vsel %vm196, %v194, %v192
          %v198 = vsel %vm196, %v195, %v193
          %v199 = vrot.slane %v194, 1
          %v200 = vrot.slane %v195, 1
          %vm201 = vcmp.ge.f32.partialorder %v199, %v197
          %v202 = vsel %vm201, %v199, %v197
          %v203 = vsel %vm201, %v200, %v198
          %v204 = vrot.slane %v199, 1
          %v205 = vrot.slane %v200, 1
          %vm206 = vcmp.ge.f32.partialorder %v204, %v202
          %v207 = vsel %vm206, %v204, %v202
          %v208 = vsel %vm206, %v205, %v203
          %v209 = vrot.slane %v204, 1
          %v210 = vrot.slane %v205, 1
          %vm211 = vcmp.ge.f32.partialorder %v209, %v207
          %v212 = vsel %vm211, %v209, %v207
          %v213 = vsel %vm211, %v210, %v208
          %v214 = vrot.slane %v209, 1
          %v215 = vrot.slane %v210, 1
          %vm216 = vcmp.ge.f32.partialorder %v214, %v212
          %v217 = vsel %vm216, %v214, %v212
          %v218 = vsel %vm216, %v215, %v213
          %v219 = vrot.slane %v214, 1
          %v220 = vrot.slane %v215, 1
          %vm221 = vcmp.ge.f32.partialorder %v219, %v217
          %v222 = vsel %vm221, %v219, %v217
          %v223 = vsel %vm221, %v220, %v218
          %s224 = ssub.s32 128, %s169
          %225 = vrot.lane.b32.xlu0 %v223, %s224
          %v226 = vpop.permute.xlu0 %225
          %s227 = vtos %v226
          %v228 = vstv %s169
          %v229 = vlaneseq
          %v230 = vand.u32 %v229, 127
          %vm231 = vcmp.eq.s32.totalorder %v230, %v228
          %v232 = vstv %s227
          %v233 = vld [vmem:[%s159] ss:$0 sm:$0xff]
          %v234 = vsel %vm231, %v232, %v233
          %235 = vst [vmem:[%s159] sm:$0x1] %v234
          %s236 = scalar_lea.vmem %s140, %s169 [#allocation1]
          %s237 = scalar_lea.vmem %s140, %s227 [#allocation1]
          %v238 = vld [vmem:[%s236] ss:$0 sm:$0xff]
          %v239 = vld [vmem:[%s237] ss:$0 sm:$0xff]
          %240 = vst [vmem:[%s237] sm:$0x1] %v238
          %241 = vst [vmem:[%s236] sm:$0x1] %v239
          %s242 = scalar_lea.vmem [#allocation7], %s169
          %s243 = scalar_lea.vmem [#allocation7], %s227
          %v244 = vld [vmem:[%s242] ss:$0 sm:$0xff]
          %v245 = vld [vmem:[%s243] ss:$0 sm:$0xff]
          %246 = vst [vmem:[%s243] sm:$0x1] %v244
          %247 = vst [vmem:[%s242] sm:$0x1] %v245
          %vm248 = vcmp.ne.f32.partialorder %v239, 0.0
          %vm249 = vmand %vm231, %vm248
          %v250 = vsel %vm249, %v239, 1.0
          %v251 = vlaneseq
          %v252 = vand.u32 %v251, 127
          %v253 = vstv %s169
          %vm254 = vcmp.gt.s32.totalorder %v252, %v253
          %v255 = vsel %vm254, %v239, 0.0
          %v256 = vlaneseq
          %v257 = vshrl.u32 %v256, 7
          %v258 = vmov %v257
          %v259 = vld [vmem:[%s140] sm:$0xff]
          %v261 = vstv %s169
          %vm262 = vcmp.gt.s32.totalorder %v258, %v261
          %v263 = vsel %vm262, %v250, 1.0
          %v264 = vrcp.pop %v263
          %v265 = vmul.f32 %v259, %v264
          %vm266 = vmand %vm262, %vm231
          %v267 = vsel %vm266, %v265, 0.0
          %268 = vadd.xlane.f32.xlu0 %v267
          %v269 = vpop.xlane.xlu0 %268
          %v270 = vmul.f32 %v269, %v255
          %v271 = vsub.f32 %v265, %v270
          %272 = vst [vmem:[%s140] sm:$0xff] %v271
        $region60: #{custom-call.34} parent=53 // loop_footer
          %s173 = sadd.s32 1, %s169
        $region61: #{custom-call.34} parent=53 // loop_footer_branch
          %168 = sbr.rel target = $region57
        $region62: #{custom-call.34} parent=53 // loop_exit
          _
        %v273 = vld [vmem:[#allocation7] sm:$0xff]
        %s274 = scalar_lea.vmem [#allocation7], 8
        %s275 = scalar_lea.vmem [#allocation7], 16
        %s276 = scalar_lea.vmem [#allocation7], 24
        %s277 = scalar_lea.vmem [#allocation7], 32
        %s278 = scalar_lea.vmem [#allocation7], 40
        %s279 = scalar_lea.vmem [#allocation7], 48
        %s280 = scalar_lea.vmem [#allocation7], 56
        %s281 = scalar_lea.vmem [#allocation7], 64
        %s282 = scalar_lea.vmem [#allocation7], 72
        %s283 = scalar_lea.vmem [#allocation7], 80
        %s284 = scalar_lea.vmem [#allocation7], 88
        %s285 = scalar_lea.vmem [#allocation7], 96
        %s286 = scalar_lea.vmem [#allocation7], 104
        %s287 = scalar_lea.vmem [#allocation7], 112
        %s288 = scalar_lea.vmem [#allocation7], 120
        %289 = vxpose.xlu0.b32.start [1/16] %v273, 128
        %290 = vxpose.xlu0.b32.cont [2/16] 0, 128
        %291 = vxpose.xlu0.b32.cont [3/16] 0, 128
        %292 = vxpose.xlu0.b32.cont [4/16] 0, 128
        %293 = vxpose.xlu0.b32.cont [5/16] 0, 128
        %294 = vxpose.xlu0.b32.cont [6/16] 0, 128
        %295 = vxpose.xlu0.b32.cont [7/16] 0, 128
        %296 = vxpose.xlu0.b32.cont [8/16] 0, 128
        %297 = vxpose.xlu0.b32.cont [9/16] 0, 128
        %298 = vxpose.xlu0.b32.cont [10/16] 0, 128
        %299 = vxpose.xlu0.b32.cont [11/16] 0, 128
        %300 = vxpose.xlu0.b32.cont [12/16] 0, 128
        %301 = vxpose.xlu0.b32.cont [13/16] 0, 128
        %302 = vxpose.xlu0.b32.cont [14/16] 0, 128
        %303 = vxpose.xlu0.b32.cont [15/16] 0, 128
        %304 = vxpose.xlu0.b32.end [16/16] 0, 128
        %v305 = vpop.trf.xlu0
        %v306 = vpop.trf.xlu0
        %v307 = vpop.trf.xlu0
        %v308 = vpop.trf.xlu0
        %v309 = vpop.trf.xlu0
        %v310 = vpop.trf.xlu0
        %v311 = vpop.trf.xlu0
        %v312 = vpop.trf.xlu0
        %v313 = vpop.trf.xlu0
        %v314 = vpop.trf.xlu0
        %v315 = vpop.trf.xlu0
        %v316 = vpop.trf.xlu0
        %v317 = vpop.trf.xlu0
        %v318 = vpop.trf.xlu0
        %v319 = vpop.trf.xlu0
        %v320 = vpop.trf.xlu0
        %321 = vst [vmem:[%s161] sm:$0x1] %v305
        %s323 = sshllo.u32 0, 4
        %v325 = vld [vmem:[#allocation2] sm:%s323]
        %s326 = sshllo.u32 0, 4
        %327 = vst [vmem:[%s147] sm:%s326] %v325
        %s329 = sshllo.u32 0, 4
        %v331 = vld [vmem:[#allocation5] sm:%s329]
        %s332 = sshllo.u32 0, 4
        %333 = vst [vmem:[%s153] sm:%s332] %v331
        %s334 = sand.u32 %s14, 1
        %s335 = sand.u32 %s14, 1
        %s336 = smul.addr %s335, 8
        %s337 = scalar_lea.vmem [#allocation1], %s336
        %s338 = sand.u32 %s24, 1
        %s339 = scalar_lea.sflag [#allocation4], %s338
        %s340 = sand.u32 %s24, 1
        %s341 = smul.addr %s340, 4
        %s342 = scalar_lea.vmem [#allocation3], %s341
        %s343 = sand.u32 %s52, 1
        %s344 = sand.u32 %s52, 1
        %s345 = smul.addr %s344, 4
        %s346 = scalar_lea.vmem [#allocation6], %s345
        %s347 = smul.addr %s14, 8
        %s348 = scalar_lea.vmem %s1, %s347
        // Predicated region
        $region63: #{custom-call.34} parent=53 // pred_check
          _
        $region64: #{custom-call.34} parent=53 // pred_check_branch
          %350 = sbr.rel (0) target = $region66
        $region65: #{custom-call.34} parent=53 // pred_region
          // Predicated region
          $region67: #{custom-call.34} parent=65 // pred_check
            _
          $region68: #{custom-call.34} parent=65 // pred_check_branch
            %352 = sbr.rel (0) target = $region70
          $region69: #{custom-call.34} parent=65 // pred_region
            // Predicated region
            $region82: #{custom-call.34} parent=69 // pred_check
              _
            $region83: #{custom-call.34} parent=69 // pred_check_branch
              %367 = sbr.rel (0) target = $region85
            $region84: #{custom-call.34} parent=69 // pred_region
              loop: start=0, step=1, limit=1
              $region86: #{custom-call.34} parent=84 // loop_pre_header
                _
              $region87: #{custom-call.34} parent=84 // loop_header
                %s369 = sphi 0, %s373
                %p370 = scmp.ge.s32.totalorder %s369, 1
                %s374 = sphi %s337, %s337
                %s375 = sphi %s348, %s348
              $region88: #{custom-call.34} parent=84 // loop_header_branch
                %372 = sbr.rel (%p370) target = $region92
              $region89: #{custom-call.34} parent=84 // loop_body
                %v376 = vld [vmem:[%s374] sm:$0xff]
                %377 = vst [vmem:[%s375] sm:$0xff] %v376
              $region90: #{custom-call.34} parent=84 // loop_footer
                %s373 = sadd.s32 1, %s369
              $region91: #{custom-call.34} parent=84 // loop_footer_branch
                %368 = sbr.rel target = $region87
              $region92: #{custom-call.34} parent=84 // loop_exit
                _
            $region85: #{custom-call.34} parent=69 // pred_fallthru
              _
            // Predicated region
            $region93: #{custom-call.34} parent=69 // pred_check
              _
            $region94: #{custom-call.34} parent=69 // pred_check_branch
              %379 = sbr.rel target = $region96
            $region95: #{custom-call.34} parent=69 // pred_region
              _
            $region96: #{custom-call.34} parent=69 // pred_fallthru
              _
          $region70: #{custom-call.34} parent=65 // pred_fallthru
            _
          // Predicated region
          $region71: #{custom-call.34} parent=65 // pred_check
            _
          $region72: #{custom-call.34} parent=65 // pred_check_branch
            %354 = sbr.rel target = $region74
          $region73: #{custom-call.34} parent=65 // pred_region
            loop: start=0, step=1, limit=1
            $region75: #{custom-call.34} parent=73 // loop_pre_header
              _
            $region76: #{custom-call.34} parent=73 // loop_header
              %s357 = sphi 0, %s361
              %p358 = scmp.ge.s32.totalorder %s357, 1
              %s362 = sphi %s337, %s337
              %s363 = sphi %s348, %s348
            $region77: #{custom-call.34} parent=73 // loop_header_branch
              %360 = sbr.rel (%p358) target = $region81
            $region78: #{custom-call.34} parent=73 // loop_body
              %v364 = vld [vmem:[%s362] sm:$0xff]
              %365 = vst [vmem:[%s363] sm:$0xff] %v364
            $region79: #{custom-call.34} parent=73 // loop_footer
              %s361 = sadd.s32 1, %s357
            $region80: #{custom-call.34} parent=73 // loop_footer_branch
              %356 = sbr.rel target = $region76
            $region81: #{custom-call.34} parent=73 // loop_exit
              _
          $region74: #{custom-call.34} parent=65 // pred_fallthru
            _
        $region66: #{custom-call.34} parent=53 // pred_fallthru
          _
        %380 = vnop
        // Predicated region
        $region97: #{custom-call.34} parent=53 // pred_check
          %p381 = pneg %p34
        $region98: #{custom-call.34} parent=53 // pred_check_branch
          %383 = sbr.rel (%p381) target = $region100
        $region99: #{custom-call.34} parent=53 // pred_region
          %s384 = sshrl.u32 %s14, 3
          %s386 = ssub.s32 64, 64
          %387 = vsyncadd %s339, %s386
          %s388 = smul.addr %s384, 64
          %s389 = scalar_lea.hbm %s2, %s388
          %s391 = sshll.u32 %s342, 4
          %s392 = int_to_ptr.vmem [resolvable:$true] %s391
          %394 = dma.vmem_to_hbm [thread:$0]  %s392, 64, %s389, %s339
        $region100: #{custom-call.34} parent=53 // pred_fallthru
          _
        // Predicated region
        $region101: #{custom-call.34} parent=53 // pred_check
          %p395 = pneg %p62
        $region102: #{custom-call.34} parent=53 // pred_check_branch
          %397 = sbr.rel (%p395) target = $region104
        $region103: #{custom-call.34} parent=53 // pred_region
          %s398 = sshrl.u32 %s14, 3
          %s399 = smul.addr %s398, 4
          %s400 = scalar_lea.vmem %s3, %s399
          // Predicated region
          $region105: #{custom-call.34} parent=103 // pred_check
            _
          $region106: #{custom-call.34} parent=103 // pred_check_branch
            %402 = sbr.rel (0) target = $region108
          $region107: #{custom-call.34} parent=103 // pred_region
            // Predicated region
            $region109: #{custom-call.34} parent=107 // pred_check
              _
            $region110: #{custom-call.34} parent=107 // pred_check_branch
              %404 = sbr.rel target = $region112
            $region111: #{custom-call.34} parent=107 // pred_region
              // Predicated region
              $region124: #{custom-call.34} parent=111 // pred_check
                _
              $region125: #{custom-call.34} parent=111 // pred_check_branch
                %419 = sbr.rel (0) target = $region127
              $region126: #{custom-call.34} parent=111 // pred_region
                loop: start=0, step=1, limit=1
                $region128: #{custom-call.34} parent=126 // loop_pre_header
                  _
                $region129: #{custom-call.34} parent=126 // loop_header
                  %s422 = sphi 0, %s426
                  %p423 = scmp.ge.s32.totalorder %s422, 1
                  %s427 = sphi %s346, %s346
                  %s428 = sphi %s400, %s400
                $region130: #{custom-call.34} parent=126 // loop_header_branch
                  %425 = sbr.rel (%p423) target = $region134
                $region131: #{custom-call.34} parent=126 // loop_body
                  %v429 = vld [vmem:[%s427] sm:$0xf]
                  %430 = vst [vmem:[%s428] sm:$0xf] %v429
                $region132: #{custom-call.34} parent=126 // loop_footer
                  %s426 = sadd.s32 1, %s422
                $region133: #{custom-call.34} parent=126 // loop_footer_branch
                  %421 = sbr.rel target = $region129
                $region134: #{custom-call.34} parent=126 // loop_exit
                  _
              $region127: #{custom-call.34} parent=111 // pred_fallthru
                _
            $region112: #{custom-call.34} parent=107 // pred_fallthru
              _
            // Predicated region
            $region113: #{custom-call.34} parent=107 // pred_check
              _
            $region114: #{custom-call.34} parent=107 // pred_check_branch
              %406 = sbr.rel (0) target = $region116
            $region115: #{custom-call.34} parent=107 // pred_region
              loop: start=0, step=1, limit=1
              $region117: #{custom-call.34} parent=115 // loop_pre_header
                _
              $region118: #{custom-call.34} parent=115 // loop_header
                %s409 = sphi 0, %s413
                %p410 = scmp.ge.s32.totalorder %s409, 1
                %s414 = sphi %s346, %s346
                %s415 = sphi %s400, %s400
              $region119: #{custom-call.34} parent=115 // loop_header_branch
                %412 = sbr.rel (%p410) target = $region123
              $region120: #{custom-call.34} parent=115 // loop_body
                %v416 = vld [vmem:[%s414] sm:$0xf]
                %417 = vst [vmem:[%s415] sm:$0xf] %v416
              $region121: #{custom-call.34} parent=115 // loop_footer
                %s413 = sadd.s32 1, %s409
              $region122: #{custom-call.34} parent=115 // loop_footer_branch
                %408 = sbr.rel target = $region118
              $region123: #{custom-call.34} parent=115 // loop_exit
                _
            $region116: #{custom-call.34} parent=107 // pred_fallthru
              _
          $region108: #{custom-call.34} parent=103 // pred_fallthru
            _
          %431 = vnop
        $region104: #{custom-call.34} parent=53 // pred_fallthru
          _
      $region54: #{custom-call.34} parent=5 // pred_fallthru
        _
      %p432 = scmp.le.s32.totalorder 2, %s9
      // Predicated region
      $region135: #{custom-call.34} parent=5 // pred_check
        %p433 = pneg %p432
      $region136: #{custom-call.34} parent=5 // pred_check_branch
        %435 = sbr.rel (%p433) target = $region138
      $region137: #{custom-call.34} parent=5 // pred_region
        %s436 = ssub.s32 %s9, 2
        %s437 = sand.u32 %s15, 1
        %s438 = sand.u32 %s15, 1
        %s439 = smul.addr %s438, 8
        %s440 = scalar_lea.vmem [#allocation1], %s439
        // Predicated region
        $region139: #{custom-call.34} parent=137 // pred_check
          %p441 = pneg %p40
        $region140: #{custom-call.34} parent=137 // pred_check_branch
          %443 = sbr.rel (%p441) target = $region142
        $region141: #{custom-call.34} parent=137 // pred_region
          %s444 = sand.u32 %s25, 1
          %s445 = scalar_lea.sflag [#allocation4], %s444
          %s446 = sand.u32 %s25, 1
          %s447 = smul.addr %s446, 4
          %s448 = scalar_lea.vmem [#allocation3], %s447
          %449 = dma.done %s445, 64
        $region142: #{custom-call.34} parent=137 // pred_fallthru
          _
        // Predicated region
        $region143: #{custom-call.34} parent=137 // pred_check
          %p450 = pneg %p68
        $region144: #{custom-call.34} parent=137 // pred_check_branch
          %452 = sbr.rel (%p450) target = $region146
        $region145: #{custom-call.34} parent=137 // pred_region
          %s453 = sand.u32 %s53, 1
          %s454 = sand.u32 %s53, 1
          %s455 = smul.addr %s454, 4
          %s456 = scalar_lea.vmem [#allocation6], %s455
        $region146: #{custom-call.34} parent=137 // pred_fallthru
          _
      $region138: #{custom-call.34} parent=5 // pred_fallthru
        _
    $region6: #{custom-call.34} parent=1 // loop_footer
      %s13 = sadd.s32 1, %s9
    $region7: #{custom-call.34} parent=1 // loop_footer_branch
      %8 = sbr.rel target = $region3
    $region8: #{custom-call.34} parent=1 // loop_exit
      _
    %457 = vsyncpa [#allocation4], 1
    %s458 = scalar_lea.sflag [#allocation4], 1
    %459 = vsyncpa %s458, 1

// kernel: custom-call.19
$region0: #{custom-call.19}
  %s0 = inlined_call_operand.vmem [shape: f32[4,1,8,8], index: 0, kind: input, shape index: {}]
  %s1 = inlined_call_operand.vmem [shape: f32[4,1,8,8], index: 1, kind: output, shape index: {}]
  $region1: #{custom-call.19} parent=0
    #allocation0 [shape = 'u8[8192]{0}', space=vmem, size = 0x2000, scoped, tag = 'operand span for operand 0']
    #allocation1 [shape = 'u8[8192]{0}', space=vmem, size = 0x2000, scoped, tag = 'operand span for operand 1']
    loop: start=0, step=1, limit=6
    $region2: #{custom-call.19} parent=1 // loop_pre_header
      _
    $region3: #{custom-call.19} parent=1 // loop_header
      %s3 = sphi 0, %s7
      %p4 = scmp.ge.s32.totalorder %s3, 6
      %s10 = sphi 0, %s36
      %s11 = sphi 0, %s32
      %s12 = sphi 0, %s28
      %s13 = sphi 0, %s24
      %s14 = sphi 0, %s10
      %s15 = sphi 0, %s11
      %s16 = sphi 0, %s12
      %s17 = sphi 0, %s13
      %s18 = sphi 0, %s14
      %s19 = sphi 0, %s15
      %s20 = sphi 0, %s16
      %s21 = sphi 0, %s17
    $region4: #{custom-call.19} parent=1 // loop_header_branch
      %6 = sbr.rel (%p4) target = $region8
    $region5: #{custom-call.19} parent=1 // loop_body
      %s8 = ssub.s32 %s3, 1
      %s9 = ssub.s32 %s3, 2
      %s22 = sadd.s32 1, %s13
      %p23 = scmp.ge.s32.totalorder %s22, 1
      %s24 = scalar_select %p23, 0, %s22
      %s25 = sadd.s32 1, %s12
      %s26 = scalar_select %p23, %s25, %s12
      %p27 = scmp.ge.s32.totalorder %s26, 1
      %s28 = scalar_select %p27, 0, %s26
      %s29 = sadd.s32 1, %s11
      %s30 = scalar_select %p27, %s29, %s11
      %p31 = scmp.ge.s32.totalorder %s30, 1
      %s32 = scalar_select %p31, 0, %s30
      %s33 = sadd.s32 1, %s10
      %s34 = scalar_select %p31, %s33, %s10
      %p35 = scmp.ge.s32.totalorder %s34, 4
      %s36 = scalar_select %p35, 0, %s34
      %p37 = scmp.le.s32.totalorder 1, %s3
      %p38 = scmp.lt.s32.totalorder %s3, 5
      %p39 = pnand %p37, %p38
      %p40 = pneg %p39
      // Predicated region
      $region9: #{custom-call.19} parent=5 // pred_check
        _
      $region10: #{custom-call.19} parent=5 // pred_check_branch
        %42 = sbr.rel (%p39) target = $region12
      $region11: #{custom-call.19} parent=5 // pred_region
        %s43 = ssub.s32 %s3, 1
      $region12: #{custom-call.19} parent=5 // pred_fallthru
        _
      %p44 = scmp.lt.s32.totalorder %s3, 4
      // Predicated region
      $region13: #{custom-call.19} parent=5 // pred_check
        %p45 = pneg %p44
      $region14: #{custom-call.19} parent=5 // pred_check_branch
        %47 = sbr.rel (%p45) target = $region16
      $region15: #{custom-call.19} parent=5 // pred_region
        %s48 = sand.u32 %s3, 1
        %s49 = sand.u32 %s3, 1
        %s50 = smul.addr %s49, 8
        %s51 = scalar_lea.vmem [#allocation0], %s50
        %s52 = sadd.s32 %s13, %s12
        %s53 = sadd.s32 %s52, %s11
        %s54 = sadd.s32 %s53, %s10
        %s55 = smul.addr %s54, 8
        %s56 = scalar_lea.vmem %s0, %s55
        // Predicated region
        $region17: #{custom-call.19} parent=15 // pred_check
          _
        $region18: #{custom-call.19} parent=15 // pred_check_branch
          %58 = sbr.rel (0) target = $region20
        $region19: #{custom-call.19} parent=15 // pred_region
          // Predicated region
          $region21: #{custom-call.19} parent=19 // pred_check
            _
          $region22: #{custom-call.19} parent=19 // pred_check_branch
            %60 = sbr.rel (0) target = $region24
          $region23: #{custom-call.19} parent=19 // pred_region
            // Predicated region
            $region36: #{custom-call.19} parent=23 // pred_check
              _
            $region37: #{custom-call.19} parent=23 // pred_check_branch
              %75 = sbr.rel (0) target = $region39
            $region38: #{custom-call.19} parent=23 // pred_region
              loop: start=0, step=1, limit=1
              $region40: #{custom-call.19} parent=38 // loop_pre_header
                _
              $region41: #{custom-call.19} parent=38 // loop_header
                %s77 = sphi 0, %s81
                %p78 = scmp.ge.s32.totalorder %s77, 1
                %s82 = sphi %s56, %s56
                %s83 = sphi %s51, %s51
              $region42: #{custom-call.19} parent=38 // loop_header_branch
                %80 = sbr.rel (%p78) target = $region46
              $region43: #{custom-call.19} parent=38 // loop_body
                %v84 = vld [vmem:[%s82] sm:$0xff]
                %85 = vst [vmem:[%s83] sm:$0xff] %v84
              $region44: #{custom-call.19} parent=38 // loop_footer
                %s81 = sadd.s32 1, %s77
              $region45: #{custom-call.19} parent=38 // loop_footer_branch
                %76 = sbr.rel target = $region41
              $region46: #{custom-call.19} parent=38 // loop_exit
                _
            $region39: #{custom-call.19} parent=23 // pred_fallthru
              _
            // Predicated region
            $region47: #{custom-call.19} parent=23 // pred_check
              _
            $region48: #{custom-call.19} parent=23 // pred_check_branch
              %87 = sbr.rel target = $region50
            $region49: #{custom-call.19} parent=23 // pred_region
              _
            $region50: #{custom-call.19} parent=23 // pred_fallthru
              _
          $region24: #{custom-call.19} parent=19 // pred_fallthru
            _
          // Predicated region
          $region25: #{custom-call.19} parent=19 // pred_check
            _
          $region26: #{custom-call.19} parent=19 // pred_check_branch
            %62 = sbr.rel target = $region28
          $region27: #{custom-call.19} parent=19 // pred_region
            loop: start=0, step=1, limit=1
            $region29: #{custom-call.19} parent=27 // loop_pre_header
              _
            $region30: #{custom-call.19} parent=27 // loop_header
              %s65 = sphi 0, %s69
              %p66 = scmp.ge.s32.totalorder %s65, 1
              %s70 = sphi %s56, %s56
              %s71 = sphi %s51, %s51
            $region31: #{custom-call.19} parent=27 // loop_header_branch
              %68 = sbr.rel (%p66) target = $region35
            $region32: #{custom-call.19} parent=27 // loop_body
              %v72 = vld [vmem:[%s70] sm:$0xff]
              %73 = vst [vmem:[%s71] sm:$0xff] %v72
            $region33: #{custom-call.19} parent=27 // loop_footer
              %s69 = sadd.s32 1, %s65
            $region34: #{custom-call.19} parent=27 // loop_footer_branch
              %64 = sbr.rel target = $region30
            $region35: #{custom-call.19} parent=27 // loop_exit
              _
          $region28: #{custom-call.19} parent=19 // pred_fallthru
            _
        $region20: #{custom-call.19} parent=15 // pred_fallthru
          _
        %88 = vnop
      $region16: #{custom-call.19} parent=5 // pred_fallthru
        _
      %p89 = scmp.le.s32.totalorder 1, %s3
      %p90 = scmp.lt.s32.totalorder %s3, 5
      %p91 = pnand %p89, %p90
      %p92 = pneg %p91
      // Predicated region
      $region51: #{custom-call.19} parent=5 // pred_check
        _
      $region52: #{custom-call.19} parent=5 // pred_check_branch
        %94 = sbr.rel (%p91) target = $region54
      $region53: #{custom-call.19} parent=5 // pred_region
        #allocation2 [shape = 'f32[8,8]{1,0}', space=vmem, size = 0x1000, scoped, tag = 'rescaled input a']
        %s95 = ssub.s32 %s3, 1
        %s96 = sand.u32 %s8, 1
        %s97 = sand.u32 %s8, 1
        %s98 = smul.addr %s97, 8
        %s99 = scalar_lea.vmem [#allocation0], %s98
        %s100 = sand.u32 %s8, 1
        %s101 = sand.u32 %s8, 1
        %s102 = smul.addr %s101, 8
        %s103 = scalar_lea.vmem [#allocation0], %s102
        %s104 = sand.u32 %s8, 1
        %s105 = sand.u32 %s8, 1
        %s106 = smul.addr %s105, 8
        %s107 = scalar_lea.vmem [#allocation1], %s106
        %v108 = vlaneseq
        %v109 = vand.u32 %v108, 127
        %vm110 = vcmp.lt.s32.totalorder %v109, 8
        %v111 = vlaneseq
        %v112 = vshrl.u32 %v111, 7
        %vm114 = vcmp.eq.s32.totalorder %v112, %v109
        %v115 = vld [vmem:[%s99] sm:$0xff]
        %v116 = vsel %vm114, %v115, 0.0
        %117 = vadd.xlane.f32.xlu0 %v116
        %v118 = vpop.xlane.xlu0 %117
        %vm119 = vcmp.ge.s32.totalorder %v112, %v109
        %vm120 = vmand %vm119, %vm110
        %v121 = vsel %vm120, %v115, 0.0
        %v122 = vrcp.pop %v118
        %v123 = vmul.f32 %v121, %v122
        %124 = vst [vmem:[#allocation2] sm:$0xff] %v123
        %v125 = vlaneseq
        %v126 = vand.u32 %v125, 127
        %v127 = vlaneseq
        %v128 = vshrl.u32 %v127, 7
        %vm130 = vcmp.eq.s32.totalorder %v126, %v128
        %v131 = vlaneseq
        %v132 = vand.u32 %v131, 127
        %vm133 = vcmp.eq.s32.totalorder %v132, 0
        %v134 = vsel %vm133, 1.0, -1.0
        %v135 = vsel %vm130, %v134, 0.0
        %s136 = scalar_lea.vmem [#allocation2], 1
        %v137 = vld [vmem:[%s136] ss:$0 sm:$0xff]
        %v138 = vxor.u32 %v137, 2147483648
        %v139 = vlaneseq
        %v140 = vand.u32 %v139, 127
        %vm141 = vcmp.eq.s32.totalorder %v140, 1
        %v142 = vmul.f32 %v138, %v135
        %143 = vadd.xlane.f32.xlu0 %v142
        %v144 = vpop.xlane.xlu0 %143
        %v145 = vsel %vm141, %v144, %v135
        %s146 = scalar_lea.vmem [#allocation2], 2
        %v147 = vld [vmem:[%s146] ss:$0 sm:$0xff]
        %v148 = vxor.u32 %v147, 2147483648
        %v149 = vlaneseq
        %v150 = vand.u32 %v149, 127
        %vm151 = vcmp.eq.s32.totalorder %v150, 2
        %v152 = vmul.f32 %v148, %v145
        %153 = vadd.xlane.f32.xlu0 %v152
        %v154 = vpop.xlane.xlu0 %153
        %v155 = vsel %vm151, %v154, %v145
        %s156 = scalar_lea.vmem [#allocation2], 3
        %v157 = vld [vmem:[%s156] ss:$0 sm:$0xff]
        %v158 = vxor.u32 %v157, 2147483648
        %v159 = vlaneseq
        %v160 = vand.u32 %v159, 127
        %vm161 = vcmp.eq.s32.totalorder %v160, 3
        %v162 = vmul.f32 %v158, %v155
        %163 = vadd.xlane.f32.xlu0 %v162
        %v164 = vpop.xlane.xlu0 %163
        %v165 = vsel %vm161, %v164, %v155
        %s166 = scalar_lea.vmem [#allocation2], 4
        %v167 = vld [vmem:[%s166] ss:$0 sm:$0xff]
        %v168 = vxor.u32 %v167, 2147483648
        %v169 = vlaneseq
        %v170 = vand.u32 %v169, 127
        %vm171 = vcmp.eq.s32.totalorder %v170, 4
        %v172 = vmul.f32 %v168, %v165
        %173 = vadd.xlane.f32.xlu0 %v172
        %v174 = vpop.xlane.xlu0 %173
        %v175 = vsel %vm171, %v174, %v165
        %s176 = scalar_lea.vmem [#allocation2], 5
        %v177 = vld [vmem:[%s176] ss:$0 sm:$0xff]
        %v178 = vxor.u32 %v177, 2147483648
        %v179 = vlaneseq
        %v180 = vand.u32 %v179, 127
        %vm181 = vcmp.eq.s32.totalorder %v180, 5
        %v182 = vmul.f32 %v178, %v175
        %183 = vadd.xlane.f32.xlu0 %v182
        %v184 = vpop.xlane.xlu0 %183
        %v185 = vsel %vm181, %v184, %v175
        %s186 = scalar_lea.vmem [#allocation2], 6
        %v187 = vld [vmem:[%s186] ss:$0 sm:$0xff]
        %v188 = vxor.u32 %v187, 2147483648
        %v189 = vlaneseq
        %v190 = vand.u32 %v189, 127
        %vm191 = vcmp.eq.s32.totalorder %v190, 6
        %v192 = vmul.f32 %v188, %v185
        %193 = vadd.xlane.f32.xlu0 %v192
        %v194 = vpop.xlane.xlu0 %193
        %v195 = vsel %vm191, %v194, %v185
        %s196 = scalar_lea.vmem [#allocation2], 7
        %v197 = vld [vmem:[%s196] ss:$0 sm:$0xff]
        %v198 = vxor.u32 %v197, 2147483648
        %v199 = vlaneseq
        %v200 = vand.u32 %v199, 127
        %vm201 = vcmp.eq.s32.totalorder %v200, 7
        %v202 = vmul.f32 %v198, %v195
        %203 = vadd.xlane.f32.xlu0 %v202
        %v204 = vpop.xlane.xlu0 %203
        %v205 = vsel %vm201, %v204, %v195
        %v206 = vrcp.pop %v118
        %v207 = vmul.f32 %v205, %v206
        %vm208 = vweird.f32 %v118
        %v209 = vsel %vm208, %v205, %v207
        %210 = vst [vmem:[%s107] sm:$0xff] %v209
        %s211 = sand.u32 %s8, 1
        %s212 = sand.u32 %s8, 1
        %s213 = smul.addr %s212, 8
        %s214 = scalar_lea.vmem [#allocation1], %s213
        %s215 = sadd.s32 %s17, %s16
        %s216 = sadd.s32 %s215, %s15
        %s217 = sadd.s32 %s216, %s14
        %s218 = smul.addr %s217, 8
        %s219 = scalar_lea.vmem %s1, %s218
        // Predicated region
        $region55: #{custom-call.19} parent=53 // pred_check
          _
        $region56: #{custom-call.19} parent=53 // pred_check_branch
          %221 = sbr.rel (0) target = $region58
        $region57: #{custom-call.19} parent=53 // pred_region
          // Predicated region
          $region59: #{custom-call.19} parent=57 // pred_check
            _
          $region60: #{custom-call.19} parent=57 // pred_check_branch
            %223 = sbr.rel (0) target = $region62
          $region61: #{custom-call.19} parent=57 // pred_region
            // Predicated region
            $region74: #{custom-call.19} parent=61 // pred_check
              _
            $region75: #{custom-call.19} parent=61 // pred_check_branch
              %238 = sbr.rel (0) target = $region77
            $region76: #{custom-call.19} parent=61 // pred_region
              loop: start=0, step=1, limit=1
              $region78: #{custom-call.19} parent=76 // loop_pre_header
                _
              $region79: #{custom-call.19} parent=76 // loop_header
                %s240 = sphi 0, %s244
                %p241 = scmp.ge.s32.totalorder %s240, 1
                %s245 = sphi %s214, %s214
                %s246 = sphi %s219, %s219
              $region80: #{custom-call.19} parent=76 // loop_header_branch
                %243 = sbr.rel (%p241) target = $region84
              $region81: #{custom-call.19} parent=76 // loop_body
                %v247 = vld [vmem:[%s245] sm:$0xff]
                %248 = vst [vmem:[%s246] sm:$0xff] %v247
              $region82: #{custom-call.19} parent=76 // loop_footer
                %s244 = sadd.s32 1, %s240
              $region83: #{custom-call.19} parent=76 // loop_footer_branch
                %239 = sbr.rel target = $region79
              $region84: #{custom-call.19} parent=76 // loop_exit
                _
            $region77: #{custom-call.19} parent=61 // pred_fallthru
              _
            // Predicated region
            $region85: #{custom-call.19} parent=61 // pred_check
              _
            $region86: #{custom-call.19} parent=61 // pred_check_branch
              %250 = sbr.rel target = $region88
            $region87: #{custom-call.19} parent=61 // pred_region
              _
            $region88: #{custom-call.19} parent=61 // pred_fallthru
              _
          $region62: #{custom-call.19} parent=57 // pred_fallthru
            _
          // Predicated region
          $region63: #{custom-call.19} parent=57 // pred_check
            _
          $region64: #{custom-call.19} parent=57 // pred_check_branch
            %225 = sbr.rel target = $region66
          $region65: #{custom-call.19} parent=57 // pred_region
            loop: start=0, step=1, limit=1
            $region67: #{custom-call.19} parent=65 // loop_pre_header
              _
            $region68: #{custom-call.19} parent=65 // loop_header
              %s228 = sphi 0, %s232
              %p229 = scmp.ge.s32.totalorder %s228, 1
              %s233 = sphi %s214, %s214
              %s234 = sphi %s219, %s219
            $region69: #{custom-call.19} parent=65 // loop_header_branch
              %231 = sbr.rel (%p229) target = $region73
            $region70: #{custom-call.19} parent=65 // loop_body
              %v235 = vld [vmem:[%s233] sm:$0xff]
              %236 = vst [vmem:[%s234] sm:$0xff] %v235
            $region71: #{custom-call.19} parent=65 // loop_footer
              %s232 = sadd.s32 1, %s228
            $region72: #{custom-call.19} parent=65 // loop_footer_branch
              %227 = sbr.rel target = $region68
            $region73: #{custom-call.19} parent=65 // loop_exit
              _
          $region66: #{custom-call.19} parent=57 // pred_fallthru
            _
        $region58: #{custom-call.19} parent=53 // pred_fallthru
          _
        %251 = vnop
      $region54: #{custom-call.19} parent=5 // pred_fallthru
        _
      %p252 = scmp.le.s32.totalorder 2, %s3
      // Predicated region
      $region89: #{custom-call.19} parent=5 // pred_check
        %p253 = pneg %p252
      $region90: #{custom-call.19} parent=5 // pred_check_branch
        %255 = sbr.rel (%p253) target = $region92
      $region91: #{custom-call.19} parent=5 // pred_region
        %s256 = ssub.s32 %s3, 2
        %s257 = sand.u32 %s9, 1
        %s258 = sand.u32 %s9, 1
        %s259 = smul.addr %s258, 8
        %s260 = scalar_lea.vmem [#allocation1], %s259
      $region92: #{custom-call.19} parent=5 // pred_fallthru
        _
    $region6: #{custom-call.19} parent=1 // loop_footer
      %s7 = sadd.s32 1, %s3
    $region7: #{custom-call.19} parent=1 // loop_footer_branch
      %2 = sbr.rel target = $region3
    $region8: #{custom-call.19} parent=1 // loop_exit
      _

// kernel: custom-call.18
$region0: #{custom-call.18}
  %s0 = inlined_call_operand.vmem [shape: f32[4,1,8,8], index: 0, kind: input, shape index: {}]
  %s1 = inlined_call_operand.vmem [shape: f32[4,1,8,8], index: 1, kind: output, shape index: {}]
  $region1: #{custom-call.18} parent=0
    #allocation0 [shape = 'u8[8192]{0}', space=vmem, size = 0x2000, scoped, tag = 'operand span for operand 0']
    #allocation1 [shape = 'u8[8192]{0}', space=vmem, size = 0x2000, scoped, tag = 'operand span for operand 1']
    loop: start=0, step=1, limit=6
    $region2: #{custom-call.18} parent=1 // loop_pre_header
      _
    $region3: #{custom-call.18} parent=1 // loop_header
      %s3 = sphi 0, %s7
      %p4 = scmp.ge.s32.totalorder %s3, 6
      %s10 = sphi 0, %s36
      %s11 = sphi 0, %s32
      %s12 = sphi 0, %s28
      %s13 = sphi 0, %s24
      %s14 = sphi 0, %s10
      %s15 = sphi 0, %s11
      %s16 = sphi 0, %s12
      %s17 = sphi 0, %s13
      %s18 = sphi 0, %s14
      %s19 = sphi 0, %s15
      %s20 = sphi 0, %s16
      %s21 = sphi 0, %s17
    $region4: #{custom-call.18} parent=1 // loop_header_branch
      %6 = sbr.rel (%p4) target = $region8
    $region5: #{custom-call.18} parent=1 // loop_body
      %s8 = ssub.s32 %s3, 1
      %s9 = ssub.s32 %s3, 2
      %s22 = sadd.s32 1, %s13
      %p23 = scmp.ge.s32.totalorder %s22, 1
      %s24 = scalar_select %p23, 0, %s22
      %s25 = sadd.s32 1, %s12
      %s26 = scalar_select %p23, %s25, %s12
      %p27 = scmp.ge.s32.totalorder %s26, 1
      %s28 = scalar_select %p27, 0, %s26
      %s29 = sadd.s32 1, %s11
      %s30 = scalar_select %p27, %s29, %s11
      %p31 = scmp.ge.s32.totalorder %s30, 1
      %s32 = scalar_select %p31, 0, %s30
      %s33 = sadd.s32 1, %s10
      %s34 = scalar_select %p31, %s33, %s10
      %p35 = scmp.ge.s32.totalorder %s34, 4
      %s36 = scalar_select %p35, 0, %s34
      %p37 = scmp.le.s32.totalorder 1, %s3
      %p38 = scmp.lt.s32.totalorder %s3, 5
      %p39 = pnand %p37, %p38
      %p40 = pneg %p39
      // Predicated region
      $region9: #{custom-call.18} parent=5 // pred_check
        _
      $region10: #{custom-call.18} parent=5 // pred_check_branch
        %42 = sbr.rel (%p39) target = $region12
      $region11: #{custom-call.18} parent=5 // pred_region
        %s43 = ssub.s32 %s3, 1
      $region12: #{custom-call.18} parent=5 // pred_fallthru
        _
      %p44 = scmp.lt.s32.totalorder %s3, 4
      // Predicated region
      $region13: #{custom-call.18} parent=5 // pred_check
        %p45 = pneg %p44
      $region14: #{custom-call.18} parent=5 // pred_check_branch
        %47 = sbr.rel (%p45) target = $region16
      $region15: #{custom-call.18} parent=5 // pred_region
        %s48 = sand.u32 %s3, 1
        %s49 = sand.u32 %s3, 1
        %s50 = smul.addr %s49, 8
        %s51 = scalar_lea.vmem [#allocation0], %s50
        %s52 = sadd.s32 %s13, %s12
        %s53 = sadd.s32 %s52, %s11
        %s54 = sadd.s32 %s53, %s10
        %s55 = smul.addr %s54, 8
        %s56 = scalar_lea.vmem %s0, %s55
        // Predicated region
        $region17: #{custom-call.18} parent=15 // pred_check
          _
        $region18: #{custom-call.18} parent=15 // pred_check_branch
          %58 = sbr.rel (0) target = $region20
        $region19: #{custom-call.18} parent=15 // pred_region
          // Predicated region
          $region21: #{custom-call.18} parent=19 // pred_check
            _
          $region22: #{custom-call.18} parent=19 // pred_check_branch
            %60 = sbr.rel (0) target = $region24
          $region23: #{custom-call.18} parent=19 // pred_region
            // Predicated region
            $region36: #{custom-call.18} parent=23 // pred_check
              _
            $region37: #{custom-call.18} parent=23 // pred_check_branch
              %75 = sbr.rel (0) target = $region39
            $region38: #{custom-call.18} parent=23 // pred_region
              loop: start=0, step=1, limit=1
              $region40: #{custom-call.18} parent=38 // loop_pre_header
                _
              $region41: #{custom-call.18} parent=38 // loop_header
                %s77 = sphi 0, %s81
                %p78 = scmp.ge.s32.totalorder %s77, 1
                %s82 = sphi %s56, %s56
                %s83 = sphi %s51, %s51
              $region42: #{custom-call.18} parent=38 // loop_header_branch
                %80 = sbr.rel (%p78) target = $region46
              $region43: #{custom-call.18} parent=38 // loop_body
                %v84 = vld [vmem:[%s82] sm:$0xff]
                %85 = vst [vmem:[%s83] sm:$0xff] %v84
              $region44: #{custom-call.18} parent=38 // loop_footer
                %s81 = sadd.s32 1, %s77
              $region45: #{custom-call.18} parent=38 // loop_footer_branch
                %76 = sbr.rel target = $region41
              $region46: #{custom-call.18} parent=38 // loop_exit
                _
            $region39: #{custom-call.18} parent=23 // pred_fallthru
              _
            // Predicated region
            $region47: #{custom-call.18} parent=23 // pred_check
              _
            $region48: #{custom-call.18} parent=23 // pred_check_branch
              %87 = sbr.rel target = $region50
            $region49: #{custom-call.18} parent=23 // pred_region
              _
            $region50: #{custom-call.18} parent=23 // pred_fallthru
              _
          $region24: #{custom-call.18} parent=19 // pred_fallthru
            _
          // Predicated region
          $region25: #{custom-call.18} parent=19 // pred_check
            _
          $region26: #{custom-call.18} parent=19 // pred_check_branch
            %62 = sbr.rel target = $region28
          $region27: #{custom-call.18} parent=19 // pred_region
            loop: start=0, step=1, limit=1
            $region29: #{custom-call.18} parent=27 // loop_pre_header
              _
            $region30: #{custom-call.18} parent=27 // loop_header
              %s65 = sphi 0, %s69
              %p66 = scmp.ge.s32.totalorder %s65, 1
              %s70 = sphi %s56, %s56
              %s71 = sphi %s51, %s51
            $region31: #{custom-call.18} parent=27 // loop_header_branch
              %68 = sbr.rel (%p66) target = $region35
            $region32: #{custom-call.18} parent=27 // loop_body
              %v72 = vld [vmem:[%s70] sm:$0xff]
              %73 = vst [vmem:[%s71] sm:$0xff] %v72
            $region33: #{custom-call.18} parent=27 // loop_footer
              %s69 = sadd.s32 1, %s65
            $region34: #{custom-call.18} parent=27 // loop_footer_branch
              %64 = sbr.rel target = $region30
            $region35: #{custom-call.18} parent=27 // loop_exit
              _
          $region28: #{custom-call.18} parent=19 // pred_fallthru
            _
        $region20: #{custom-call.18} parent=15 // pred_fallthru
          _
        %88 = vnop
      $region16: #{custom-call.18} parent=5 // pred_fallthru
        _
      %p89 = scmp.le.s32.totalorder 1, %s3
      %p90 = scmp.lt.s32.totalorder %s3, 5
      %p91 = pnand %p89, %p90
      %p92 = pneg %p91
      // Predicated region
      $region51: #{custom-call.18} parent=5 // pred_check
        _
      $region52: #{custom-call.18} parent=5 // pred_check_branch
        %94 = sbr.rel (%p91) target = $region54
      $region53: #{custom-call.18} parent=5 // pred_region
        #allocation2 [shape = 'f32[8,8]{1,0}', space=vmem, size = 0x1000, scoped, tag = 'rescaled input a']
        %s95 = ssub.s32 %s3, 1
        %s96 = sand.u32 %s8, 1
        %s97 = sand.u32 %s8, 1
        %s98 = smul.addr %s97, 8
        %s99 = scalar_lea.vmem [#allocation0], %s98
        %s100 = sand.u32 %s8, 1
        %s101 = sand.u32 %s8, 1
        %s102 = smul.addr %s101, 8
        %s103 = scalar_lea.vmem [#allocation0], %s102
        %s104 = sand.u32 %s8, 1
        %s105 = sand.u32 %s8, 1
        %s106 = smul.addr %s105, 8
        %s107 = scalar_lea.vmem [#allocation1], %s106
        %v108 = vlaneseq
        %v109 = vand.u32 %v108, 127
        %vm110 = vcmp.lt.s32.totalorder %v109, 8
        %v111 = vlaneseq
        %v112 = vshrl.u32 %v111, 7
        %vm114 = vcmp.eq.s32.totalorder %v112, %v109
        %v115 = vld [vmem:[%s99] sm:$0xff]
        %v116 = vsel %vm114, %v115, 0.0
        %117 = vadd.xlane.f32.xlu0 %v116
        %v118 = vpop.xlane.xlu0 %117
        %vm119 = vcmp.le.s32.totalorder %v112, %v109
        %vm120 = vmand %vm119, %vm110
        %v121 = vsel %vm120, %v115, 0.0
        %v122 = vrcp.pop %v118
        %v123 = vmul.f32 %v121, %v122
        %124 = vst [vmem:[#allocation2] sm:$0xff] %v123
        %v125 = vlaneseq
        %v126 = vand.u32 %v125, 127
        %v127 = vlaneseq
        %v128 = vshrl.u32 %v127, 7
        %vm130 = vcmp.eq.s32.totalorder %v126, %v128
        %v131 = vlaneseq
        %v132 = vand.u32 %v131, 127
        %vm133 = vcmp.eq.s32.totalorder %v132, 7
        %v134 = vsel %vm133, 1.0, -1.0
        %v135 = vsel %vm130, %v134, 0.0
        %s136 = scalar_lea.vmem [#allocation2], 6
        %v137 = vld [vmem:[%s136] ss:$0 sm:$0xff]
        %v138 = vxor.u32 %v137, 2147483648
        %v139 = vlaneseq
        %v140 = vand.u32 %v139, 127
        %vm141 = vcmp.eq.s32.totalorder %v140, 6
        %v142 = vmul.f32 %v138, %v135
        %143 = vadd.xlane.f32.xlu0 %v142
        %v144 = vpop.xlane.xlu0 %143
        %v145 = vsel %vm141, %v144, %v135
        %s146 = scalar_lea.vmem [#allocation2], 5
        %v147 = vld [vmem:[%s146] ss:$0 sm:$0xff]
        %v148 = vxor.u32 %v147, 2147483648
        %v149 = vlaneseq
        %v150 = vand.u32 %v149, 127
        %vm151 = vcmp.eq.s32.totalorder %v150, 5
        %v152 = vmul.f32 %v148, %v145
        %153 = vadd.xlane.f32.xlu0 %v152
        %v154 = vpop.xlane.xlu0 %153
        %v155 = vsel %vm151, %v154, %v145
        %s156 = scalar_lea.vmem [#allocation2], 4
        %v157 = vld [vmem:[%s156] ss:$0 sm:$0xff]
        %v158 = vxor.u32 %v157, 2147483648
        %v159 = vlaneseq
        %v160 = vand.u32 %v159, 127
        %vm161 = vcmp.eq.s32.totalorder %v160, 4
        %v162 = vmul.f32 %v158, %v155
        %163 = vadd.xlane.f32.xlu0 %v162
        %v164 = vpop.xlane.xlu0 %163
        %v165 = vsel %vm161, %v164, %v155
        %s166 = scalar_lea.vmem [#allocation2], 3
        %v167 = vld [vmem:[%s166] ss:$0 sm:$0xff]
        %v168 = vxor.u32 %v167, 2147483648
        %v169 = vlaneseq
        %v170 = vand.u32 %v169, 127
        %vm171 = vcmp.eq.s32.totalorder %v170, 3
        %v172 = vmul.f32 %v168, %v165
        %173 = vadd.xlane.f32.xlu0 %v172
        %v174 = vpop.xlane.xlu0 %173
        %v175 = vsel %vm171, %v174, %v165
        %s176 = scalar_lea.vmem [#allocation2], 2
        %v177 = vld [vmem:[%s176] ss:$0 sm:$0xff]
        %v178 = vxor.u32 %v177, 2147483648
        %v179 = vlaneseq
        %v180 = vand.u32 %v179, 127
        %vm181 = vcmp.eq.s32.totalorder %v180, 2
        %v182 = vmul.f32 %v178, %v175
        %183 = vadd.xlane.f32.xlu0 %v182
        %v184 = vpop.xlane.xlu0 %183
        %v185 = vsel %vm181, %v184, %v175
        %s186 = scalar_lea.vmem [#allocation2], 1
        %v187 = vld [vmem:[%s186] ss:$0 sm:$0xff]
        %v188 = vxor.u32 %v187, 2147483648
        %v189 = vlaneseq
        %v190 = vand.u32 %v189, 127
        %vm191 = vcmp.eq.s32.totalorder %v190, 1
        %v192 = vmul.f32 %v188, %v185
        %193 = vadd.xlane.f32.xlu0 %v192
        %v194 = vpop.xlane.xlu0 %193
        %v195 = vsel %vm191, %v194, %v185
        %v196 = vld [vmem:[#allocation2] ss:$0 sm:$0xff]
        %v197 = vxor.u32 %v196, 2147483648
        %v198 = vlaneseq
        %v199 = vand.u32 %v198, 127
        %vm200 = vcmp.eq.s32.totalorder %v199, 0
        %v201 = vmul.f32 %v197, %v195
        %202 = vadd.xlane.f32.xlu0 %v201
        %v203 = vpop.xlane.xlu0 %202
        %v204 = vsel %vm200, %v203, %v195
        %v205 = vrcp.pop %v118
        %v206 = vmul.f32 %v204, %v205
        %vm207 = vweird.f32 %v118
        %v208 = vsel %vm207, %v204, %v206
        %209 = vst [vmem:[%s107] sm:$0xff] %v208
        %s210 = sand.u32 %s8, 1
        %s211 = sand.u32 %s8, 1
        %s212 = smul.addr %s211, 8
        %s213 = scalar_lea.vmem [#allocation1], %s212
        %s214 = sadd.s32 %s17, %s16
        %s215 = sadd.s32 %s214, %s15
        %s216 = sadd.s32 %s215, %s14
        %s217 = smul.addr %s216, 8
        %s218 = scalar_lea.vmem %s1, %s217
        // Predicated region
        $region55: #{custom-call.18} parent=53 // pred_check
          _
        $region56: #{custom-call.18} parent=53 // pred_check_branch
          %220 = sbr.rel (0) target = $region58
        $region57: #{custom-call.18} parent=53 // pred_region
          // Predicated region
          $region59: #{custom-call.18} parent=57 // pred_check
            _
          $region60: #{custom-call.18} parent=57 // pred_check_branch
            %222 = sbr.rel (0) target = $region62
          $region61: #{custom-call.18} parent=57 // pred_region
            // Predicated region
            $region74: #{custom-call.18} parent=61 // pred_check
              _
            $region75: #{custom-call.18} parent=61 // pred_check_branch
              %237 = sbr.rel (0) target = $region77
            $region76: #{custom-call.18} parent=61 // pred_region
              loop: start=0, step=1, limit=1
              $region78: #{custom-call.18} parent=76 // loop_pre_header
                _
              $region79: #{custom-call.18} parent=76 // loop_header
                %s239 = sphi 0, %s243
                %p240 = scmp.ge.s32.totalorder %s239, 1
                %s244 = sphi %s213, %s213
                %s245 = sphi %s218, %s218
              $region80: #{custom-call.18} parent=76 // loop_header_branch
                %242 = sbr.rel (%p240) target = $region84
              $region81: #{custom-call.18} parent=76 // loop_body
                %v246 = vld [vmem:[%s244] sm:$0xff]
                %247 = vst [vmem:[%s245] sm:$0xff] %v246
              $region82: #{custom-call.18} parent=76 // loop_footer
                %s243 = sadd.s32 1, %s239
              $region83: #{custom-call.18} parent=76 // loop_footer_branch
                %238 = sbr.rel target = $region79
              $region84: #{custom-call.18} parent=76 // loop_exit
                _
            $region77: #{custom-call.18} parent=61 // pred_fallthru
              _
            // Predicated region
            $region85: #{custom-call.18} parent=61 // pred_check
              _
            $region86: #{custom-call.18} parent=61 // pred_check_branch
              %249 = sbr.rel target = $region88
            $region87: #{custom-call.18} parent=61 // pred_region
              _
            $region88: #{custom-call.18} parent=61 // pred_fallthru
              _
          $region62: #{custom-call.18} parent=57 // pred_fallthru
            _
          // Predicated region
          $region63: #{custom-call.18} parent=57 // pred_check
            _
          $region64: #{custom-call.18} parent=57 // pred_check_branch
            %224 = sbr.rel target = $region66
          $region65: #{custom-call.18} parent=57 // pred_region
            loop: start=0, step=1, limit=1
            $region67: #{custom-call.18} parent=65 // loop_pre_header
              _
            $region68: #{custom-call.18} parent=65 // loop_header
              %s227 = sphi 0, %s231
              %p228 = scmp.ge.s32.totalorder %s227, 1
              %s232 = sphi %s213, %s213
              %s233 = sphi %s218, %s218
            $region69: #{custom-call.18} parent=65 // loop_header_branch
              %230 = sbr.rel (%p228) target = $region73
            $region70: #{custom-call.18} parent=65 // loop_body
              %v234 = vld [vmem:[%s232] sm:$0xff]
              %235 = vst [vmem:[%s233] sm:$0xff] %v234
            $region71: #{custom-call.18} parent=65 // loop_footer
              %s231 = sadd.s32 1, %s227
            $region72: #{custom-call.18} parent=65 // loop_footer_branch
              %226 = sbr.rel target = $region68
            $region73: #{custom-call.18} parent=65 // loop_exit
              _
          $region66: #{custom-call.18} parent=57 // pred_fallthru
            _
        $region58: #{custom-call.18} parent=53 // pred_fallthru
          _
        %250 = vnop
      $region54: #{custom-call.18} parent=5 // pred_fallthru
        _
      %p251 = scmp.le.s32.totalorder 2, %s3
      // Predicated region
      $region89: #{custom-call.18} parent=5 // pred_check
        %p252 = pneg %p251
      $region90: #{custom-call.18} parent=5 // pred_check_branch
        %254 = sbr.rel (%p252) target = $region92
      $region91: #{custom-call.18} parent=5 // pred_region
        %s255 = ssub.s32 %s3, 2
        %s256 = sand.u32 %s9, 1
        %s257 = sand.u32 %s9, 1
        %s258 = smul.addr %s257, 8
        %s259 = scalar_lea.vmem [#allocation1], %s258
      $region92: #{custom-call.18} parent=5 // pred_fallthru
        _
    $region6: #{custom-call.18} parent=1 // loop_footer
      %s7 = sadd.s32 1, %s3
    $region7: #{custom-call.18} parent=1 // loop_footer_branch
      %2 = sbr.rel target = $region3
    $region8: #{custom-call.18} parent=1 // loop_exit
      _

// kernel: custom-call.36
$region0: #{custom-call.36}
  %s0 = inlined_call_operand.vmem [shape: f32[6,8,8], index: 0, kind: input, shape index: {}]
  %s1 = inlined_call_operand.vmem [shape: f32[6,8,8], index: 1, kind: output, shape index: {0}]
  %s2 = inlined_call_operand.hbm [shape: s32[6,8], index: 2, kind: output, shape index: {1}]
  %s3 = inlined_call_operand.vmem [shape: s32[6,8], index: 3, kind: output, shape index: {2}]
  %4 = xla_tuple %s1, %s2, %s3
  $region1: #{custom-call.36} parent=0
    #allocation0 [shape = 'u8[8192]{0}', space=vmem, size = 0x2000, scoped, tag = 'operand span for operand 0']
    #allocation1 [shape = 'u8[8192]{0}', space=vmem, size = 0x2000, scoped, tag = 'operand span for operand 1']
    #allocation2 [shape = 'u8[8192]{0}', space=vmem, size = 0x2000, scoped, tag = 'operand span for operand 2']
    #allocation3 [shape = 's32[2]{0}', space=sflag, size = 0x8, scoped, tag = 'scoped memory for custom-call.36']
    #allocation4 [shape = 'u8[8192]{0}', space=vmem, size = 0x2000, scoped, tag = 'operand span for operand 3']
    %5 = vsyncpa [#allocation3], 0
    %s6 = scalar_lea.sflag [#allocation3], 1
    %7 = vsyncpa %s6, 0
    loop: start=0, step=1, limit=8
    $region2: #{custom-call.36} parent=1 // loop_pre_header
      _
    $region3: #{custom-call.36} parent=1 // loop_header
      %s9 = sphi 0, %s13
      %p10 = scmp.ge.s32.totalorder %s9, 8
      %s21 = sphi 0, %s23
      %s24 = sphi 0, %s21
      %s25 = sphi 0, %s24
      %s41 = sphi 0, %s25
      %s49 = sphi 0, %s51
      %s52 = sphi 0, %s49
      %s53 = sphi 0, %s52
      %s69 = sphi 0, %s53
    $region4: #{custom-call.36} parent=1 // loop_header_branch
      %12 = sbr.rel (%p10) target = $region8
    $region5: #{custom-call.36} parent=1 // loop_body
      %s14 = ssub.s32 %s9, 1
      %s15 = ssub.s32 %s9, 2
      %s16 = sadd.s32 %s9, 1
      %s17 = sshrl.u32 %s9, 3
      %s18 = sshrl.u32 %s16, 3
      %s19 = ssub.s32 %s17, %s18
      %p20 = scmp.eq.s32.totalorder %s19, 0
      %s22 = sadd.s32 %s21, 1
      %s23 = scalar_select %p20, %s21, %s22
      %p26 = pneg %p20
      %p27 = scmp.eq.s32.totalorder %s9, 5
      %p28 = por %p26, %p27
      %p29 = scmp.ne.s32.totalorder %s21, %s24
      %p30 = scmp.eq.s32.totalorder %s9, 0
      %p31 = por %p29, %p30
      %p32 = scmp.ne.s32.totalorder %s21, %s24
      %p33 = scmp.eq.s32.totalorder %s14, 5
      %p34 = por %p32, %p33
      %p35 = scmp.ne.s32.totalorder %s24, %s25
      %p36 = scmp.eq.s32.totalorder %s14, 0
      %p37 = por %p35, %p36
      %p38 = scmp.ne.s32.totalorder %s24, %s25
      %p39 = scmp.eq.s32.totalorder %s15, 5
      %p40 = por %p38, %p39
      %p42 = scmp.ne.s32.totalorder %s25, %s41
      %p43 = scmp.eq.s32.totalorder %s15, 0
      %p44 = por %p42, %p43
      %s45 = sshrl.u32 %s9, 3
      %s46 = sshrl.u32 %s16, 3
      %s47 = ssub.s32 %s45, %s46
      %p48 = scmp.eq.s32.totalorder %s47, 0
      %s50 = sadd.s32 %s49, 1
      %s51 = scalar_select %p48, %s49, %s50
      %p54 = pneg %p48
      %p55 = scmp.eq.s32.totalorder %s9, 5
      %p56 = por %p54, %p55
      %p57 = scmp.ne.s32.totalorder %s49, %s52
      %p58 = scmp.eq.s32.totalorder %s9, 0
      %p59 = por %p57, %p58
      %p60 = scmp.ne.s32.totalorder %s49, %s52
      %p61 = scmp.eq.s32.totalorder %s14, 5
      %p62 = por %p60, %p61
      %p63 = scmp.ne.s32.totalorder %s52, %s53
      %p64 = scmp.eq.s32.totalorder %s14, 0
      %p65 = por %p63, %p64
      %p66 = scmp.ne.s32.totalorder %s52, %s53
      %p67 = scmp.eq.s32.totalorder %s15, 5
      %p68 = por %p66, %p67
      %p70 = scmp.ne.s32.totalorder %s53, %s69
      %p71 = scmp.eq.s32.totalorder %s15, 0
      %p72 = por %p70, %p71
      %p73 = scmp.le.s32.totalorder 1, %s9
      %p74 = scmp.lt.s32.totalorder %s9, 7
      %p75 = pnand %p73, %p74
      %p76 = pneg %p75
      // Predicated region
      $region9: #{custom-call.36} parent=5 // pred_check
        _
      $region10: #{custom-call.36} parent=5 // pred_check_branch
        %78 = sbr.rel (%p75) target = $region12
      $region11: #{custom-call.36} parent=5 // pred_region
        %s79 = ssub.s32 %s9, 1
      $region12: #{custom-call.36} parent=5 // pred_fallthru
        _
      %p80 = scmp.lt.s32.totalorder %s9, 6
      // Predicated region
      $region13: #{custom-call.36} parent=5 // pred_check
        %p81 = pneg %p80
      $region14: #{custom-call.36} parent=5 // pred_check_branch
        %83 = sbr.rel (%p81) target = $region16
      $region15: #{custom-call.36} parent=5 // pred_region
        %s84 = sand.u32 %s9, 1
        %s85 = sand.u32 %s9, 1
        %s86 = smul.addr %s85, 8
        %s87 = scalar_lea.vmem [#allocation0], %s86
        %s88 = smul.addr %s9, 8
        %s89 = scalar_lea.vmem %s0, %s88
        // Predicated region
        $region17: #{custom-call.36} parent=15 // pred_check
          _
        $region18: #{custom-call.36} parent=15 // pred_check_branch
          %91 = sbr.rel (0) target = $region20
        $region19: #{custom-call.36} parent=15 // pred_region
          // Predicated region
          $region21: #{custom-call.36} parent=19 // pred_check
            _
          $region22: #{custom-call.36} parent=19 // pred_check_branch
            %93 = sbr.rel (0) target = $region24
          $region23: #{custom-call.36} parent=19 // pred_region
            // Predicated region
            $region36: #{custom-call.36} parent=23 // pred_check
              _
            $region37: #{custom-call.36} parent=23 // pred_check_branch
              %108 = sbr.rel (0) target = $region39
            $region38: #{custom-call.36} parent=23 // pred_region
              loop: start=0, step=1, limit=1
              $region40: #{custom-call.36} parent=38 // loop_pre_header
                _
              $region41: #{custom-call.36} parent=38 // loop_header
                %s110 = sphi 0, %s114
                %p111 = scmp.ge.s32.totalorder %s110, 1
                %s115 = sphi %s89, %s89
                %s116 = sphi %s87, %s87
              $region42: #{custom-call.36} parent=38 // loop_header_branch
                %113 = sbr.rel (%p111) target = $region46
              $region43: #{custom-call.36} parent=38 // loop_body
                %v117 = vld [vmem:[%s115] sm:$0xff]
                %118 = vst [vmem:[%s116] sm:$0xff] %v117
              $region44: #{custom-call.36} parent=38 // loop_footer
                %s114 = sadd.s32 1, %s110
              $region45: #{custom-call.36} parent=38 // loop_footer_branch
                %109 = sbr.rel target = $region41
              $region46: #{custom-call.36} parent=38 // loop_exit
                _
            $region39: #{custom-call.36} parent=23 // pred_fallthru
              _
            // Predicated region
            $region47: #{custom-call.36} parent=23 // pred_check
              _
            $region48: #{custom-call.36} parent=23 // pred_check_branch
              %120 = sbr.rel target = $region50
            $region49: #{custom-call.36} parent=23 // pred_region
              _
            $region50: #{custom-call.36} parent=23 // pred_fallthru
              _
          $region24: #{custom-call.36} parent=19 // pred_fallthru
            _
          // Predicated region
          $region25: #{custom-call.36} parent=19 // pred_check
            _
          $region26: #{custom-call.36} parent=19 // pred_check_branch
            %95 = sbr.rel target = $region28
          $region27: #{custom-call.36} parent=19 // pred_region
            loop: start=0, step=1, limit=1
            $region29: #{custom-call.36} parent=27 // loop_pre_header
              _
            $region30: #{custom-call.36} parent=27 // loop_header
              %s98 = sphi 0, %s102
              %p99 = scmp.ge.s32.totalorder %s98, 1
              %s103 = sphi %s89, %s89
              %s104 = sphi %s87, %s87
            $region31: #{custom-call.36} parent=27 // loop_header_branch
              %101 = sbr.rel (%p99) target = $region35
            $region32: #{custom-call.36} parent=27 // loop_body
              %v105 = vld [vmem:[%s103] sm:$0xff]
              %106 = vst [vmem:[%s104] sm:$0xff] %v105
            $region33: #{custom-call.36} parent=27 // loop_footer
              %s102 = sadd.s32 1, %s98
            $region34: #{custom-call.36} parent=27 // loop_footer_branch
              %97 = sbr.rel target = $region30
            $region35: #{custom-call.36} parent=27 // loop_exit
              _
          $region28: #{custom-call.36} parent=19 // pred_fallthru
            _
        $region20: #{custom-call.36} parent=15 // pred_fallthru
          _
        %121 = vnop
      $region16: #{custom-call.36} parent=5 // pred_fallthru
        _
      %p122 = scmp.le.s32.totalorder 1, %s9
      %p123 = scmp.lt.s32.totalorder %s9, 7
      %p124 = pnand %p122, %p123
      %p125 = pneg %p124
      // Predicated region
      $region51: #{custom-call.36} parent=5 // pred_check
        _
      $region52: #{custom-call.36} parent=5 // pred_check_branch
        %127 = sbr.rel (%p124) target = $region54
      $region53: #{custom-call.36} parent=5 // pred_region
        #allocation5 [shape = 's32[8,128]{1,0}', space=vmem, size = 0x1000, scoped, tag = 'scratch for permutations']
        %s128 = ssub.s32 %s9, 1
        %s129 = sand.u32 %s14, 1
        %s130 = sand.u32 %s14, 1
        %s131 = smul.addr %s130, 8
        %s132 = scalar_lea.vmem [#allocation0], %s131
        %s133 = sand.u32 %s14, 1
        %s134 = sand.u32 %s14, 1
        %s135 = smul.addr %s134, 8
        %s136 = scalar_lea.vmem [#allocation0], %s135
        %s137 = sand.u32 %s14, 1
        %s138 = sand.u32 %s14, 1
        %s139 = smul.addr %s138, 8
        %s140 = scalar_lea.vmem [#allocation1], %s139
        %p141 = pneg %p37
        %p142 = pneg %p34
        %s143 = sand.u32 %s24, 1
        %s144 = scalar_lea.sflag [#allocation3], %s143
        %s145 = sand.u32 %s24, 1
        %s146 = smul.addr %s145, 8
        %s147 = scalar_lea.vmem [#allocation2], %s146
        %p148 = pneg %p65
        %p149 = pneg %p62
        %s150 = sand.u32 %s52, 1
        %s151 = sand.u32 %s52, 1
        %s152 = smul.addr %s151, 8
        %s153 = scalar_lea.vmem [#allocation4], %s152
        %s154 = sshrl.u32 %s14, 3
        %s155 = sshrl.u32 %s14, 3
        %v156 = vld [vmem:[%s132] sm:$0xff]
        %157 = vst [vmem:[%s140] sm:$0xff] %v156
        %s158 = sand.u32 %s14, 7
        %s159 = scalar_lea.vmem %s147, %s158 [#allocation2]
        %s160 = sand.u32 %s14, 7
        %s161 = scalar_lea.vmem %s153, %s160 [#allocation4]
        %162 = vst [vmem:[%s159] sm:$0x1] 0
        %v163 = vlaneseq
        %v164 = vshrl.u32 %v163, 7
        %v165 = vmov %v164
        %167 = vst [vmem:[#allocation5] sm:$0xff] %v165
        loop: start=0, step=1, limit=8
        $region56: #{custom-call.36} parent=53 // loop_pre_header
          _
        $region57: #{custom-call.36} parent=53 // loop_header
          %s169 = sphi 0, %s173
          %p170 = scmp.ge.s32.totalorder %s169, 8
        $region58: #{custom-call.36} parent=53 // loop_header_branch
          %172 = sbr.rel (%p170) target = $region62
        $region59: #{custom-call.36} parent=53 // loop_body
          %v174 = vstv %s169
          %v175 = vlaneseq
          %v176 = vshrl.u32 %v175, 7
          %v177 = vmov %v176
          %v178 = vld [vmem:[%s140] sm:$0xff]
          %v179 = vand.u32 2147483647, %v178
          %v181 = vstv %s169
          %vm182 = vcmp.ge.s32.totalorder %v177, %v181
          %vm183 = vcmp.lt.s32.totalorder %v177, 8
          %vm184 = vmand %vm182, %vm183
          %vm185 = vcmp.lt.f32.partialorder -inf, %v179
          %vm186 = vmand %vm184, %vm185
          %v187 = vsel %vm186, %v177, %v174
          %v188 = vsel %vm186, %v179, -inf
          %v189 = vrot.slane %v188, 1
          %v190 = vrot.slane %v187, 1
          %vm191 = vcmp.ge.f32.partialorder %v189, %v188
          %v192 = vsel %vm191, %v189, %v188
          %v193 = vsel %vm191, %v190, %v187
          %v194 = vrot.slane %v189, 1
          %v195 = vrot.slane %v190, 1
          %vm196 = vcmp.ge.f32.partialorder %v194, %v192
          %v197 = vsel %vm196, %v194, %v192
          %v198 = vsel %vm196, %v195, %v193
          %v199 = vrot.slane %v194, 1
          %v200 = vrot.slane %v195, 1
          %vm201 = vcmp.ge.f32.partialorder %v199, %v197
          %v202 = vsel %vm201, %v199, %v197
          %v203 = vsel %vm201, %v200, %v198
          %v204 = vrot.slane %v199, 1
          %v205 = vrot.slane %v200, 1
          %vm206 = vcmp.ge.f32.partialorder %v204, %v202
          %v207 = vsel %vm206, %v204, %v202
          %v208 = vsel %vm206, %v205, %v203
          %v209 = vrot.slane %v204, 1
          %v210 = vrot.slane %v205, 1
          %vm211 = vcmp.ge.f32.partialorder %v209, %v207
          %v212 = vsel %vm211, %v209, %v207
          %v213 = vsel %vm211, %v210, %v208
          %v214 = vrot.slane %v209, 1
          %v215 = vrot.slane %v210, 1
          %vm216 = vcmp.ge.f32.partialorder %v214, %v212
          %v217 = vsel %vm216, %v214, %v212
          %v218 = vsel %vm216, %v215, %v213
          %v219 = vrot.slane %v214, 1
          %v220 = vrot.slane %v215, 1
          %vm221 = vcmp.ge.f32.partialorder %v219, %v217
          %v222 = vsel %vm221, %v219, %v217
          %v223 = vsel %vm221, %v220, %v218
          %s224 = ssub.s32 128, %s169
          %225 = vrot.lane.b32.xlu0 %v223, %s224
          %v226 = vpop.permute.xlu0 %225
          %s227 = vtos %v226
          %v228 = vstv %s169
          %v229 = vlaneseq
          %v230 = vand.u32 %v229, 127
          %vm231 = vcmp.eq.s32.totalorder %v230, %v228
          %v232 = vstv %s227
          %v233 = vld [vmem:[%s159] ss:$0 sm:$0xff]
          %v234 = vsel %vm231, %v232, %v233
          %235 = vst [vmem:[%s159] sm:$0x1] %v234
          %s236 = scalar_lea.vmem %s140, %s169 [#allocation1]
          %s237 = scalar_lea.vmem %s140, %s227 [#allocation1]
          %v238 = vld [vmem:[%s236] ss:$0 sm:$0xff]
          %v239 = vld [vmem:[%s237] ss:$0 sm:$0xff]
          %240 = vst [vmem:[%s237] sm:$0x1] %v238
          %241 = vst [vmem:[%s236] sm:$0x1] %v239
          %s242 = scalar_lea.vmem [#allocation5], %s169
          %s243 = scalar_lea.vmem [#allocation5], %s227
          %v244 = vld [vmem:[%s242] ss:$0 sm:$0xff]
          %v245 = vld [vmem:[%s243] ss:$0 sm:$0xff]
          %246 = vst [vmem:[%s243] sm:$0x1] %v244
          %247 = vst [vmem:[%s242] sm:$0x1] %v245
          %vm248 = vcmp.ne.f32.partialorder %v239, 0.0
          %vm249 = vmand %vm231, %vm248
          %v250 = vsel %vm249, %v239, 1.0
          %v251 = vlaneseq
          %v252 = vand.u32 %v251, 127
          %v253 = vstv %s169
          %vm254 = vcmp.gt.s32.totalorder %v252, %v253
          %v255 = vsel %vm254, %v239, 0.0
          %v256 = vlaneseq
          %v257 = vshrl.u32 %v256, 7
          %v258 = vmov %v257
          %v259 = vld [vmem:[%s140] sm:$0xff]
          %v261 = vstv %s169
          %vm262 = vcmp.gt.s32.totalorder %v258, %v261
          %v263 = vsel %vm262, %v250, 1.0
          %v264 = vrcp.pop %v263
          %v265 = vmul.f32 %v259, %v264
          %vm266 = vmand %vm262, %vm231
          %v267 = vsel %vm266, %v265, 0.0
          %268 = vadd.xlane.f32.xlu0 %v267
          %v269 = vpop.xlane.xlu0 %268
          %v270 = vmul.f32 %v269, %v255
          %v271 = vsub.f32 %v265, %v270
          %272 = vst [vmem:[%s140] sm:$0xff] %v271
        $region60: #{custom-call.36} parent=53 // loop_footer
          %s173 = sadd.s32 1, %s169
        $region61: #{custom-call.36} parent=53 // loop_footer_branch
          %168 = sbr.rel target = $region57
        $region62: #{custom-call.36} parent=53 // loop_exit
          _
        %v273 = vld [vmem:[#allocation5] sm:$0xff]
        %s274 = scalar_lea.vmem [#allocation5], 8
        %s275 = scalar_lea.vmem [#allocation5], 16
        %s276 = scalar_lea.vmem [#allocation5], 24
        %s277 = scalar_lea.vmem [#allocation5], 32
        %s278 = scalar_lea.vmem [#allocation5], 40
        %s279 = scalar_lea.vmem [#allocation5], 48
        %s280 = scalar_lea.vmem [#allocation5], 56
        %s281 = scalar_lea.vmem [#allocation5], 64
        %s282 = scalar_lea.vmem [#allocation5], 72
        %s283 = scalar_lea.vmem [#allocation5], 80
        %s284 = scalar_lea.vmem [#allocation5], 88
        %s285 = scalar_lea.vmem [#allocation5], 96
        %s286 = scalar_lea.vmem [#allocation5], 104
        %s287 = scalar_lea.vmem [#allocation5], 112
        %s288 = scalar_lea.vmem [#allocation5], 120
        %289 = vxpose.xlu0.b32.start [1/16] %v273, 128
        %290 = vxpose.xlu0.b32.cont [2/16] 0, 128
        %291 = vxpose.xlu0.b32.cont [3/16] 0, 128
        %292 = vxpose.xlu0.b32.cont [4/16] 0, 128
        %293 = vxpose.xlu0.b32.cont [5/16] 0, 128
        %294 = vxpose.xlu0.b32.cont [6/16] 0, 128
        %295 = vxpose.xlu0.b32.cont [7/16] 0, 128
        %296 = vxpose.xlu0.b32.cont [8/16] 0, 128
        %297 = vxpose.xlu0.b32.cont [9/16] 0, 128
        %298 = vxpose.xlu0.b32.cont [10/16] 0, 128
        %299 = vxpose.xlu0.b32.cont [11/16] 0, 128
        %300 = vxpose.xlu0.b32.cont [12/16] 0, 128
        %301 = vxpose.xlu0.b32.cont [13/16] 0, 128
        %302 = vxpose.xlu0.b32.cont [14/16] 0, 128
        %303 = vxpose.xlu0.b32.cont [15/16] 0, 128
        %304 = vxpose.xlu0.b32.end [16/16] 0, 128
        %v305 = vpop.trf.xlu0
        %v306 = vpop.trf.xlu0
        %v307 = vpop.trf.xlu0
        %v308 = vpop.trf.xlu0
        %v309 = vpop.trf.xlu0
        %v310 = vpop.trf.xlu0
        %v311 = vpop.trf.xlu0
        %v312 = vpop.trf.xlu0
        %v313 = vpop.trf.xlu0
        %v314 = vpop.trf.xlu0
        %v315 = vpop.trf.xlu0
        %v316 = vpop.trf.xlu0
        %v317 = vpop.trf.xlu0
        %v318 = vpop.trf.xlu0
        %v319 = vpop.trf.xlu0
        %v320 = vpop.trf.xlu0
        %321 = vst [vmem:[%s161] sm:$0x1] %v305
        %s322 = sand.u32 %s14, 1
        %s323 = sand.u32 %s14, 1
        %s324 = smul.addr %s323, 8
        %s325 = scalar_lea.vmem [#allocation1], %s324
        %s326 = sand.u32 %s24, 1
        %s327 = scalar_lea.sflag [#allocation3], %s326
        %s328 = sand.u32 %s24, 1
        %s329 = smul.addr %s328, 8
        %s330 = scalar_lea.vmem [#allocation2], %s329
        %s331 = sand.u32 %s52, 1
        %s332 = sand.u32 %s52, 1
        %s333 = smul.addr %s332, 8
        %s334 = scalar_lea.vmem [#allocation4], %s333
        %s335 = smul.addr %s14, 8
        %s336 = scalar_lea.vmem %s1, %s335
        // Predicated region
        $region63: #{custom-call.36} parent=53 // pred_check
          _
        $region64: #{custom-call.36} parent=53 // pred_check_branch
          %338 = sbr.rel (0) target = $region66
        $region65: #{custom-call.36} parent=53 // pred_region
          // Predicated region
          $region67: #{custom-call.36} parent=65 // pred_check
            _
          $region68: #{custom-call.36} parent=65 // pred_check_branch
            %340 = sbr.rel (0) target = $region70
          $region69: #{custom-call.36} parent=65 // pred_region
            // Predicated region
            $region82: #{custom-call.36} parent=69 // pred_check
              _
            $region83: #{custom-call.36} parent=69 // pred_check_branch
              %355 = sbr.rel (0) target = $region85
            $region84: #{custom-call.36} parent=69 // pred_region
              loop: start=0, step=1, limit=1
              $region86: #{custom-call.36} parent=84 // loop_pre_header
                _
              $region87: #{custom-call.36} parent=84 // loop_header
                %s357 = sphi 0, %s361
                %p358 = scmp.ge.s32.totalorder %s357, 1
                %s362 = sphi %s325, %s325
                %s363 = sphi %s336, %s336
              $region88: #{custom-call.36} parent=84 // loop_header_branch
                %360 = sbr.rel (%p358) target = $region92
              $region89: #{custom-call.36} parent=84 // loop_body
                %v364 = vld [vmem:[%s362] sm:$0xff]
                %365 = vst [vmem:[%s363] sm:$0xff] %v364
              $region90: #{custom-call.36} parent=84 // loop_footer
                %s361 = sadd.s32 1, %s357
              $region91: #{custom-call.36} parent=84 // loop_footer_branch
                %356 = sbr.rel target = $region87
              $region92: #{custom-call.36} parent=84 // loop_exit
                _
            $region85: #{custom-call.36} parent=69 // pred_fallthru
              _
            // Predicated region
            $region93: #{custom-call.36} parent=69 // pred_check
              _
            $region94: #{custom-call.36} parent=69 // pred_check_branch
              %367 = sbr.rel target = $region96
            $region95: #{custom-call.36} parent=69 // pred_region
              _
            $region96: #{custom-call.36} parent=69 // pred_fallthru
              _
          $region70: #{custom-call.36} parent=65 // pred_fallthru
            _
          // Predicated region
          $region71: #{custom-call.36} parent=65 // pred_check
            _
          $region72: #{custom-call.36} parent=65 // pred_check_branch
            %342 = sbr.rel target = $region74
          $region73: #{custom-call.36} parent=65 // pred_region
            loop: start=0, step=1, limit=1
            $region75: #{custom-call.36} parent=73 // loop_pre_header
              _
            $region76: #{custom-call.36} parent=73 // loop_header
              %s345 = sphi 0, %s349
              %p346 = scmp.ge.s32.totalorder %s345, 1
              %s350 = sphi %s325, %s325
              %s351 = sphi %s336, %s336
            $region77: #{custom-call.36} parent=73 // loop_header_branch
              %348 = sbr.rel (%p346) target = $region81
            $region78: #{custom-call.36} parent=73 // loop_body
              %v352 = vld [vmem:[%s350] sm:$0xff]
              %353 = vst [vmem:[%s351] sm:$0xff] %v352
            $region79: #{custom-call.36} parent=73 // loop_footer
              %s349 = sadd.s32 1, %s345
            $region80: #{custom-call.36} parent=73 // loop_footer_branch
              %344 = sbr.rel target = $region76
            $region81: #{custom-call.36} parent=73 // loop_exit
              _
          $region74: #{custom-call.36} parent=65 // pred_fallthru
            _
        $region66: #{custom-call.36} parent=53 // pred_fallthru
          _
        %368 = vnop
        // Predicated region
        $region97: #{custom-call.36} parent=53 // pred_check
          %p369 = pneg %p34
        $region98: #{custom-call.36} parent=53 // pred_check_branch
          %371 = sbr.rel (%p369) target = $region100
        $region99: #{custom-call.36} parent=53 // pred_region
          %s372 = sshrl.u32 %s14, 3
          %s374 = ssub.s32 128, 128
          %375 = vsyncadd %s327, %s374
          %s376 = smul.addr %s372, 128
          %s377 = scalar_lea.hbm %s2, %s376
          %s379 = sshll.u32 %s330, 4
          %s380 = int_to_ptr.vmem [resolvable:$true] %s379
          %382 = dma.vmem_to_hbm [thread:$0]  %s380, 128, %s377, %s327
        $region100: #{custom-call.36} parent=53 // pred_fallthru
          _
        // Predicated region
        $region101: #{custom-call.36} parent=53 // pred_check
          %p383 = pneg %p62
        $region102: #{custom-call.36} parent=53 // pred_check_branch
          %385 = sbr.rel (%p383) target = $region104
        $region103: #{custom-call.36} parent=53 // pred_region
          %s386 = sshrl.u32 %s14, 3
          %s387 = smul.addr %s386, 8
          %s388 = scalar_lea.vmem %s3, %s387
          // Predicated region
          $region105: #{custom-call.36} parent=103 // pred_check
            _
          $region106: #{custom-call.36} parent=103 // pred_check_branch
            %390 = sbr.rel (0) target = $region108
          $region107: #{custom-call.36} parent=103 // pred_region
            // Predicated region
            $region109: #{custom-call.36} parent=107 // pred_check
              _
            $region110: #{custom-call.36} parent=107 // pred_check_branch
              %392 = sbr.rel (0) target = $region112
            $region111: #{custom-call.36} parent=107 // pred_region
              // Predicated region
              $region124: #{custom-call.36} parent=111 // pred_check
                _
              $region125: #{custom-call.36} parent=111 // pred_check_branch
                %407 = sbr.rel (0) target = $region127
              $region126: #{custom-call.36} parent=111 // pred_region
                loop: start=0, step=1, limit=1
                $region128: #{custom-call.36} parent=126 // loop_pre_header
                  _
                $region129: #{custom-call.36} parent=126 // loop_header
                  %s409 = sphi 0, %s413
                  %p410 = scmp.ge.s32.totalorder %s409, 1
                  %s414 = sphi %s334, %s334
                  %s415 = sphi %s388, %s388
                $region130: #{custom-call.36} parent=126 // loop_header_branch
                  %412 = sbr.rel (%p410) target = $region134
                $region131: #{custom-call.36} parent=126 // loop_body
                  %v416 = vld [vmem:[%s414] sm:$0xff]
                  %417 = vst [vmem:[%s415] sm:$0xff] %v416
                $region132: #{custom-call.36} parent=126 // loop_footer
                  %s413 = sadd.s32 1, %s409
                $region133: #{custom-call.36} parent=126 // loop_footer_branch
                  %408 = sbr.rel target = $region129
                $region134: #{custom-call.36} parent=126 // loop_exit
                  _
              $region127: #{custom-call.36} parent=111 // pred_fallthru
                _
              // Predicated region
              $region135: #{custom-call.36} parent=111 // pred_check
                _
              $region136: #{custom-call.36} parent=111 // pred_check_branch
                %419 = sbr.rel target = $region138
              $region137: #{custom-call.36} parent=111 // pred_region
                _
              $region138: #{custom-call.36} parent=111 // pred_fallthru
                _
            $region112: #{custom-call.36} parent=107 // pred_fallthru
              _
            // Predicated region
            $region113: #{custom-call.36} parent=107 // pred_check
              _
            $region114: #{custom-call.36} parent=107 // pred_check_branch
              %394 = sbr.rel target = $region116
            $region115: #{custom-call.36} parent=107 // pred_region
              loop: start=0, step=1, limit=1
              $region117: #{custom-call.36} parent=115 // loop_pre_header
                _
              $region118: #{custom-call.36} parent=115 // loop_header
                %s397 = sphi 0, %s401
                %p398 = scmp.ge.s32.totalorder %s397, 1
                %s402 = sphi %s334, %s334
                %s403 = sphi %s388, %s388
              $region119: #{custom-call.36} parent=115 // loop_header_branch
                %400 = sbr.rel (%p398) target = $region123
              $region120: #{custom-call.36} parent=115 // loop_body
                %v404 = vld [vmem:[%s402] sm:$0xff]
                %405 = vst [vmem:[%s403] sm:$0xff] %v404
              $region121: #{custom-call.36} parent=115 // loop_footer
                %s401 = sadd.s32 1, %s397
              $region122: #{custom-call.36} parent=115 // loop_footer_branch
                %396 = sbr.rel target = $region118
              $region123: #{custom-call.36} parent=115 // loop_exit
                _
            $region116: #{custom-call.36} parent=107 // pred_fallthru
              _
          $region108: #{custom-call.36} parent=103 // pred_fallthru
            _
          %420 = vnop
        $region104: #{custom-call.36} parent=53 // pred_fallthru
          _
      $region54: #{custom-call.36} parent=5 // pred_fallthru
        _
      %p421 = scmp.le.s32.totalorder 2, %s9
      // Predicated region
      $region139: #{custom-call.36} parent=5 // pred_check
        %p422 = pneg %p421
      $region140: #{custom-call.36} parent=5 // pred_check_branch
        %424 = sbr.rel (%p422) target = $region142
      $region141: #{custom-call.36} parent=5 // pred_region
        %s425 = ssub.s32 %s9, 2
        %s426 = sand.u32 %s15, 1
        %s427 = sand.u32 %s15, 1
        %s428 = smul.addr %s427, 8
        %s429 = scalar_lea.vmem [#allocation1], %s428
        // Predicated region
        $region143: #{custom-call.36} parent=141 // pred_check
          %p430 = pneg %p40
        $region144: #{custom-call.36} parent=141 // pred_check_branch
          %432 = sbr.rel (%p430) target = $region146
        $region145: #{custom-call.36} parent=141 // pred_region
          %s433 = sand.u32 %s25, 1
          %s434 = scalar_lea.sflag [#allocation3], %s433
          %s435 = sand.u32 %s25, 1
          %s436 = smul.addr %s435, 8
          %s437 = scalar_lea.vmem [#allocation2], %s436
          %438 = dma.done %s434, 128
        $region146: #{custom-call.36} parent=141 // pred_fallthru
          _
        // Predicated region
        $region147: #{custom-call.36} parent=141 // pred_check
          %p439 = pneg %p68
        $region148: #{custom-call.36} parent=141 // pred_check_branch
          %441 = sbr.rel (%p439) target = $region150
        $region149: #{custom-call.36} parent=141 // pred_region
          %s442 = sand.u32 %s53, 1
          %s443 = sand.u32 %s53, 1
          %s444 = smul.addr %s443, 8
          %s445 = scalar_lea.vmem [#allocation4], %s444
        $region150: #{custom-call.36} parent=141 // pred_fallthru
          _
      $region142: #{custom-call.36} parent=5 // pred_fallthru
        _
    $region6: #{custom-call.36} parent=1 // loop_footer
      %s13 = sadd.s32 1, %s9
    $region7: #{custom-call.36} parent=1 // loop_footer_branch
      %8 = sbr.rel target = $region3
    $region8: #{custom-call.36} parent=1 // loop_exit
      _
    %446 = vsyncpa [#allocation3], 1
    %s447 = scalar_lea.sflag [#allocation3], 1
    %448 = vsyncpa %s447, 1

// kernel: custom-call.21
$region0: #{custom-call.21}
  %s0 = inlined_call_operand.vmem [shape: f32[6,1,8,8], index: 0, kind: input, shape index: {}]
  %s1 = inlined_call_operand.vmem [shape: f32[6,1,8,8], index: 1, kind: output, shape index: {}]
  $region1: #{custom-call.21} parent=0
    #allocation0 [shape = 'u8[8192]{0}', space=vmem, size = 0x2000, scoped, tag = 'operand span for operand 0']
    #allocation1 [shape = 'u8[8192]{0}', space=vmem, size = 0x2000, scoped, tag = 'operand span for operand 1']
    loop: start=0, step=1, limit=8
    $region2: #{custom-call.21} parent=1 // loop_pre_header
      _
    $region3: #{custom-call.21} parent=1 // loop_header
      %s3 = sphi 0, %s7
      %p4 = scmp.ge.s32.totalorder %s3, 8
      %s10 = sphi 0, %s36
      %s11 = sphi 0, %s32
      %s12 = sphi 0, %s28
      %s13 = sphi 0, %s24
      %s14 = sphi 0, %s10
      %s15 = sphi 0, %s11
      %s16 = sphi 0, %s12
      %s17 = sphi 0, %s13
      %s18 = sphi 0, %s14
      %s19 = sphi 0, %s15
      %s20 = sphi 0, %s16
      %s21 = sphi 0, %s17
    $region4: #{custom-call.21} parent=1 // loop_header_branch
      %6 = sbr.rel (%p4) target = $region8
    $region5: #{custom-call.21} parent=1 // loop_body
      %s8 = ssub.s32 %s3, 1
      %s9 = ssub.s32 %s3, 2
      %s22 = sadd.s32 1, %s13
      %p23 = scmp.ge.s32.totalorder %s22, 1
      %s24 = scalar_select %p23, 0, %s22
      %s25 = sadd.s32 1, %s12
      %s26 = scalar_select %p23, %s25, %s12
      %p27 = scmp.ge.s32.totalorder %s26, 1
      %s28 = scalar_select %p27, 0, %s26
      %s29 = sadd.s32 1, %s11
      %s30 = scalar_select %p27, %s29, %s11
      %p31 = scmp.ge.s32.totalorder %s30, 1
      %s32 = scalar_select %p31, 0, %s30
      %s33 = sadd.s32 1, %s10
      %s34 = scalar_select %p31, %s33, %s10
      %p35 = scmp.ge.s32.totalorder %s34, 6
      %s36 = scalar_select %p35, 0, %s34
      %p37 = scmp.le.s32.totalorder 1, %s3
      %p38 = scmp.lt.s32.totalorder %s3, 7
      %p39 = pnand %p37, %p38
      %p40 = pneg %p39
      // Predicated region
      $region9: #{custom-call.21} parent=5 // pred_check
        _
      $region10: #{custom-call.21} parent=5 // pred_check_branch
        %42 = sbr.rel (%p39) target = $region12
      $region11: #{custom-call.21} parent=5 // pred_region
        %s43 = ssub.s32 %s3, 1
      $region12: #{custom-call.21} parent=5 // pred_fallthru
        _
      %p44 = scmp.lt.s32.totalorder %s3, 6
      // Predicated region
      $region13: #{custom-call.21} parent=5 // pred_check
        %p45 = pneg %p44
      $region14: #{custom-call.21} parent=5 // pred_check_branch
        %47 = sbr.rel (%p45) target = $region16
      $region15: #{custom-call.21} parent=5 // pred_region
        %s48 = sand.u32 %s3, 1
        %s49 = sand.u32 %s3, 1
        %s50 = smul.addr %s49, 8
        %s51 = scalar_lea.vmem [#allocation0], %s50
        %s52 = sadd.s32 %s13, %s12
        %s53 = sadd.s32 %s52, %s11
        %s54 = sadd.s32 %s53, %s10
        %s55 = smul.addr %s54, 8
        %s56 = scalar_lea.vmem %s0, %s55
        // Predicated region
        $region17: #{custom-call.21} parent=15 // pred_check
          _
        $region18: #{custom-call.21} parent=15 // pred_check_branch
          %58 = sbr.rel (0) target = $region20
        $region19: #{custom-call.21} parent=15 // pred_region
          // Predicated region
          $region21: #{custom-call.21} parent=19 // pred_check
            _
          $region22: #{custom-call.21} parent=19 // pred_check_branch
            %60 = sbr.rel (0) target = $region24
          $region23: #{custom-call.21} parent=19 // pred_region
            // Predicated region
            $region36: #{custom-call.21} parent=23 // pred_check
              _
            $region37: #{custom-call.21} parent=23 // pred_check_branch
              %75 = sbr.rel (0) target = $region39
            $region38: #{custom-call.21} parent=23 // pred_region
              loop: start=0, step=1, limit=1
              $region40: #{custom-call.21} parent=38 // loop_pre_header
                _
              $region41: #{custom-call.21} parent=38 // loop_header
                %s77 = sphi 0, %s81
                %p78 = scmp.ge.s32.totalorder %s77, 1
                %s82 = sphi %s56, %s56
                %s83 = sphi %s51, %s51
              $region42: #{custom-call.21} parent=38 // loop_header_branch
                %80 = sbr.rel (%p78) target = $region46
              $region43: #{custom-call.21} parent=38 // loop_body
                %v84 = vld [vmem:[%s82] sm:$0xff]
                %85 = vst [vmem:[%s83] sm:$0xff] %v84
              $region44: #{custom-call.21} parent=38 // loop_footer
                %s81 = sadd.s32 1, %s77
              $region45: #{custom-call.21} parent=38 // loop_footer_branch
                %76 = sbr.rel target = $region41
              $region46: #{custom-call.21} parent=38 // loop_exit
                _
            $region39: #{custom-call.21} parent=23 // pred_fallthru
              _
            // Predicated region
            $region47: #{custom-call.21} parent=23 // pred_check
              _
            $region48: #{custom-call.21} parent=23 // pred_check_branch
              %87 = sbr.rel target = $region50
            $region49: #{custom-call.21} parent=23 // pred_region
              _
            $region50: #{custom-call.21} parent=23 // pred_fallthru
              _
          $region24: #{custom-call.21} parent=19 // pred_fallthru
            _
          // Predicated region
          $region25: #{custom-call.21} parent=19 // pred_check
            _
          $region26: #{custom-call.21} parent=19 // pred_check_branch
            %62 = sbr.rel target = $region28
          $region27: #{custom-call.21} parent=19 // pred_region
            loop: start=0, step=1, limit=1
            $region29: #{custom-call.21} parent=27 // loop_pre_header
              _
            $region30: #{custom-call.21} parent=27 // loop_header
              %s65 = sphi 0, %s69
              %p66 = scmp.ge.s32.totalorder %s65, 1
              %s70 = sphi %s56, %s56
              %s71 = sphi %s51, %s51
            $region31: #{custom-call.21} parent=27 // loop_header_branch
              %68 = sbr.rel (%p66) target = $region35
            $region32: #{custom-call.21} parent=27 // loop_body
              %v72 = vld [vmem:[%s70] sm:$0xff]
              %73 = vst [vmem:[%s71] sm:$0xff] %v72
            $region33: #{custom-call.21} parent=27 // loop_footer
              %s69 = sadd.s32 1, %s65
            $region34: #{custom-call.21} parent=27 // loop_footer_branch
              %64 = sbr.rel target = $region30
            $region35: #{custom-call.21} parent=27 // loop_exit
              _
          $region28: #{custom-call.21} parent=19 // pred_fallthru
            _
        $region20: #{custom-call.21} parent=15 // pred_fallthru
          _
        %88 = vnop
      $region16: #{custom-call.21} parent=5 // pred_fallthru
        _
      %p89 = scmp.le.s32.totalorder 1, %s3
      %p90 = scmp.lt.s32.totalorder %s3, 7
      %p91 = pnand %p89, %p90
      %p92 = pneg %p91
      // Predicated region
      $region51: #{custom-call.21} parent=5 // pred_check
        _
      $region52: #{custom-call.21} parent=5 // pred_check_branch
        %94 = sbr.rel (%p91) target = $region54
      $region53: #{custom-call.21} parent=5 // pred_region
        #allocation2 [shape = 'f32[8,8]{1,0}', space=vmem, size = 0x1000, scoped, tag = 'rescaled input a']
        %s95 = ssub.s32 %s3, 1
        %s96 = sand.u32 %s8, 1
        %s97 = sand.u32 %s8, 1
        %s98 = smul.addr %s97, 8
        %s99 = scalar_lea.vmem [#allocation0], %s98
        %s100 = sand.u32 %s8, 1
        %s101 = sand.u32 %s8, 1
        %s102 = smul.addr %s101, 8
        %s103 = scalar_lea.vmem [#allocation0], %s102
        %s104 = sand.u32 %s8, 1
        %s105 = sand.u32 %s8, 1
        %s106 = smul.addr %s105, 8
        %s107 = scalar_lea.vmem [#allocation1], %s106
        %v108 = vlaneseq
        %v109 = vand.u32 %v108, 127
        %vm110 = vcmp.lt.s32.totalorder %v109, 8
        %v111 = vlaneseq
        %v112 = vshrl.u32 %v111, 7
        %vm114 = vcmp.eq.s32.totalorder %v112, %v109
        %v115 = vld [vmem:[%s99] sm:$0xff]
        %v116 = vsel %vm114, %v115, 0.0
        %117 = vadd.xlane.f32.xlu0 %v116
        %v118 = vpop.xlane.xlu0 %117
        %vm119 = vcmp.ge.s32.totalorder %v112, %v109
        %vm120 = vmand %vm119, %vm110
        %v121 = vsel %vm120, %v115, 0.0
        %v122 = vrcp.pop %v118
        %v123 = vmul.f32 %v121, %v122
        %124 = vst [vmem:[#allocation2] sm:$0xff] %v123
        %v125 = vlaneseq
        %v126 = vand.u32 %v125, 127
        %v127 = vlaneseq
        %v128 = vshrl.u32 %v127, 7
        %vm130 = vcmp.eq.s32.totalorder %v126, %v128
        %v131 = vlaneseq
        %v132 = vand.u32 %v131, 127
        %vm133 = vcmp.eq.s32.totalorder %v132, 0
        %v134 = vsel %vm133, 1.0, -1.0
        %v135 = vsel %vm130, %v134, 0.0
        %s136 = scalar_lea.vmem [#allocation2], 1
        %v137 = vld [vmem:[%s136] ss:$0 sm:$0xff]
        %v138 = vxor.u32 %v137, 2147483648
        %v139 = vlaneseq
        %v140 = vand.u32 %v139, 127
        %vm141 = vcmp.eq.s32.totalorder %v140, 1
        %v142 = vmul.f32 %v138, %v135
        %143 = vadd.xlane.f32.xlu0 %v142
        %v144 = vpop.xlane.xlu0 %143
        %v145 = vsel %vm141, %v144, %v135
        %s146 = scalar_lea.vmem [#allocation2], 2
        %v147 = vld [vmem:[%s146] ss:$0 sm:$0xff]
        %v148 = vxor.u32 %v147, 2147483648
        %v149 = vlaneseq
        %v150 = vand.u32 %v149, 127
        %vm151 = vcmp.eq.s32.totalorder %v150, 2
        %v152 = vmul.f32 %v148, %v145
        %153 = vadd.xlane.f32.xlu0 %v152
        %v154 = vpop.xlane.xlu0 %153
        %v155 = vsel %vm151, %v154, %v145
        %s156 = scalar_lea.vmem [#allocation2], 3
        %v157 = vld [vmem:[%s156] ss:$0 sm:$0xff]
        %v158 = vxor.u32 %v157, 2147483648
        %v159 = vlaneseq
        %v160 = vand.u32 %v159, 127
        %vm161 = vcmp.eq.s32.totalorder %v160, 3
        %v162 = vmul.f32 %v158, %v155
        %163 = vadd.xlane.f32.xlu0 %v162
        %v164 = vpop.xlane.xlu0 %163
        %v165 = vsel %vm161, %v164, %v155
        %s166 = scalar_lea.vmem [#allocation2], 4
        %v167 = vld [vmem:[%s166] ss:$0 sm:$0xff]
        %v168 = vxor.u32 %v167, 2147483648
        %v169 = vlaneseq
        %v170 = vand.u32 %v169, 127
        %vm171 = vcmp.eq.s32.totalorder %v170, 4
        %v172 = vmul.f32 %v168, %v165
        %173 = vadd.xlane.f32.xlu0 %v172
        %v174 = vpop.xlane.xlu0 %173
        %v175 = vsel %vm171, %v174, %v165
        %s176 = scalar_lea.vmem [#allocation2], 5
        %v177 = vld [vmem:[%s176] ss:$0 sm:$0xff]
        %v178 = vxor.u32 %v177, 2147483648
        %v179 = vlaneseq
        %v180 = vand.u32 %v179, 127
        %vm181 = vcmp.eq.s32.totalorder %v180, 5
        %v182 = vmul.f32 %v178, %v175
        %183 = vadd.xlane.f32.xlu0 %v182
        %v184 = vpop.xlane.xlu0 %183
        %v185 = vsel %vm181, %v184, %v175
        %s186 = scalar_lea.vmem [#allocation2], 6
        %v187 = vld [vmem:[%s186] ss:$0 sm:$0xff]
        %v188 = vxor.u32 %v187, 2147483648
        %v189 = vlaneseq
        %v190 = vand.u32 %v189, 127
        %vm191 = vcmp.eq.s32.totalorder %v190, 6
        %v192 = vmul.f32 %v188, %v185
        %193 = vadd.xlane.f32.xlu0 %v192
        %v194 = vpop.xlane.xlu0 %193
        %v195 = vsel %vm191, %v194, %v185
        %s196 = scalar_lea.vmem [#allocation2], 7
        %v197 = vld [vmem:[%s196] ss:$0 sm:$0xff]
        %v198 = vxor.u32 %v197, 2147483648
        %v199 = vlaneseq
        %v200 = vand.u32 %v199, 127
        %vm201 = vcmp.eq.s32.totalorder %v200, 7
        %v202 = vmul.f32 %v198, %v195
        %203 = vadd.xlane.f32.xlu0 %v202
        %v204 = vpop.xlane.xlu0 %203
        %v205 = vsel %vm201, %v204, %v195
        %v206 = vrcp.pop %v118
        %v207 = vmul.f32 %v205, %v206
        %vm208 = vweird.f32 %v118
        %v209 = vsel %vm208, %v205, %v207
        %210 = vst [vmem:[%s107] sm:$0xff] %v209
        %s211 = sand.u32 %s8, 1
        %s212 = sand.u32 %s8, 1
        %s213 = smul.addr %s212, 8
        %s214 = scalar_lea.vmem [#allocation1], %s213
        %s215 = sadd.s32 %s17, %s16
        %s216 = sadd.s32 %s215, %s15
        %s217 = sadd.s32 %s216, %s14
        %s218 = smul.addr %s217, 8
        %s219 = scalar_lea.vmem %s1, %s218
        // Predicated region
        $region55: #{custom-call.21} parent=53 // pred_check
          _
        $region56: #{custom-call.21} parent=53 // pred_check_branch
          %221 = sbr.rel (0) target = $region58
        $region57: #{custom-call.21} parent=53 // pred_region
          // Predicated region
          $region59: #{custom-call.21} parent=57 // pred_check
            _
          $region60: #{custom-call.21} parent=57 // pred_check_branch
            %223 = sbr.rel (0) target = $region62
          $region61: #{custom-call.21} parent=57 // pred_region
            // Predicated region
            $region74: #{custom-call.21} parent=61 // pred_check
              _
            $region75: #{custom-call.21} parent=61 // pred_check_branch
              %238 = sbr.rel (0) target = $region77
            $region76: #{custom-call.21} parent=61 // pred_region
              loop: start=0, step=1, limit=1
              $region78: #{custom-call.21} parent=76 // loop_pre_header
                _
              $region79: #{custom-call.21} parent=76 // loop_header
                %s240 = sphi 0, %s244
                %p241 = scmp.ge.s32.totalorder %s240, 1
                %s245 = sphi %s214, %s214
                %s246 = sphi %s219, %s219
              $region80: #{custom-call.21} parent=76 // loop_header_branch
                %243 = sbr.rel (%p241) target = $region84
              $region81: #{custom-call.21} parent=76 // loop_body
                %v247 = vld [vmem:[%s245] sm:$0xff]
                %248 = vst [vmem:[%s246] sm:$0xff] %v247
              $region82: #{custom-call.21} parent=76 // loop_footer
                %s244 = sadd.s32 1, %s240
              $region83: #{custom-call.21} parent=76 // loop_footer_branch
                %239 = sbr.rel target = $region79
              $region84: #{custom-call.21} parent=76 // loop_exit
                _
            $region77: #{custom-call.21} parent=61 // pred_fallthru
              _
            // Predicated region
            $region85: #{custom-call.21} parent=61 // pred_check
              _
            $region86: #{custom-call.21} parent=61 // pred_check_branch
              %250 = sbr.rel target = $region88
            $region87: #{custom-call.21} parent=61 // pred_region
              _
            $region88: #{custom-call.21} parent=61 // pred_fallthru
              _
          $region62: #{custom-call.21} parent=57 // pred_fallthru
            _
          // Predicated region
          $region63: #{custom-call.21} parent=57 // pred_check
            _
          $region64: #{custom-call.21} parent=57 // pred_check_branch
            %225 = sbr.rel target = $region66
          $region65: #{custom-call.21} parent=57 // pred_region
            loop: start=0, step=1, limit=1
            $region67: #{custom-call.21} parent=65 // loop_pre_header
              _
            $region68: #{custom-call.21} parent=65 // loop_header
              %s228 = sphi 0, %s232
              %p229 = scmp.ge.s32.totalorder %s228, 1
              %s233 = sphi %s214, %s214
              %s234 = sphi %s219, %s219
            $region69: #{custom-call.21} parent=65 // loop_header_branch
              %231 = sbr.rel (%p229) target = $region73
            $region70: #{custom-call.21} parent=65 // loop_body
              %v235 = vld [vmem:[%s233] sm:$0xff]
              %236 = vst [vmem:[%s234] sm:$0xff] %v235
            $region71: #{custom-call.21} parent=65 // loop_footer
              %s232 = sadd.s32 1, %s228
            $region72: #{custom-call.21} parent=65 // loop_footer_branch
              %227 = sbr.rel target = $region68
            $region73: #{custom-call.21} parent=65 // loop_exit
              _
          $region66: #{custom-call.21} parent=57 // pred_fallthru
            _
        $region58: #{custom-call.21} parent=53 // pred_fallthru
          _
        %251 = vnop
      $region54: #{custom-call.21} parent=5 // pred_fallthru
        _
      %p252 = scmp.le.s32.totalorder 2, %s3
      // Predicated region
      $region89: #{custom-call.21} parent=5 // pred_check
        %p253 = pneg %p252
      $region90: #{custom-call.21} parent=5 // pred_check_branch
        %255 = sbr.rel (%p253) target = $region92
      $region91: #{custom-call.21} parent=5 // pred_region
        %s256 = ssub.s32 %s3, 2
        %s257 = sand.u32 %s9, 1
        %s258 = sand.u32 %s9, 1
        %s259 = smul.addr %s258, 8
        %s260 = scalar_lea.vmem [#allocation1], %s259
      $region92: #{custom-call.21} parent=5 // pred_fallthru
        _
    $region6: #{custom-call.21} parent=1 // loop_footer
      %s7 = sadd.s32 1, %s3
    $region7: #{custom-call.21} parent=1 // loop_footer_branch
      %2 = sbr.rel target = $region3
    $region8: #{custom-call.21} parent=1 // loop_exit
      _

// kernel: custom-call.20
$region0: #{custom-call.20}
  %s0 = inlined_call_operand.vmem [shape: f32[6,1,8,8], index: 0, kind: input, shape index: {}]
  %s1 = inlined_call_operand.vmem [shape: f32[6,1,8,8], index: 1, kind: output, shape index: {}]
  $region1: #{custom-call.20} parent=0
    #allocation0 [shape = 'u8[8192]{0}', space=vmem, size = 0x2000, scoped, tag = 'operand span for operand 0']
    #allocation1 [shape = 'u8[8192]{0}', space=vmem, size = 0x2000, scoped, tag = 'operand span for operand 1']
    loop: start=0, step=1, limit=8
    $region2: #{custom-call.20} parent=1 // loop_pre_header
      _
    $region3: #{custom-call.20} parent=1 // loop_header
      %s3 = sphi 0, %s7
      %p4 = scmp.ge.s32.totalorder %s3, 8
      %s10 = sphi 0, %s36
      %s11 = sphi 0, %s32
      %s12 = sphi 0, %s28
      %s13 = sphi 0, %s24
      %s14 = sphi 0, %s10
      %s15 = sphi 0, %s11
      %s16 = sphi 0, %s12
      %s17 = sphi 0, %s13
      %s18 = sphi 0, %s14
      %s19 = sphi 0, %s15
      %s20 = sphi 0, %s16
      %s21 = sphi 0, %s17
    $region4: #{custom-call.20} parent=1 // loop_header_branch
      %6 = sbr.rel (%p4) target = $region8
    $region5: #{custom-call.20} parent=1 // loop_body
      %s8 = ssub.s32 %s3, 1
      %s9 = ssub.s32 %s3, 2
      %s22 = sadd.s32 1, %s13
      %p23 = scmp.ge.s32.totalorder %s22, 1
      %s24 = scalar_select %p23, 0, %s22
      %s25 = sadd.s32 1, %s12
      %s26 = scalar_select %p23, %s25, %s12
      %p27 = scmp.ge.s32.totalorder %s26, 1
      %s28 = scalar_select %p27, 0, %s26
      %s29 = sadd.s32 1, %s11
      %s30 = scalar_select %p27, %s29, %s11
      %p31 = scmp.ge.s32.totalorder %s30, 1
      %s32 = scalar_select %p31, 0, %s30
      %s33 = sadd.s32 1, %s10
      %s34 = scalar_select %p31, %s33, %s10
      %p35 = scmp.ge.s32.totalorder %s34, 6
      %s36 = scalar_select %p35, 0, %s34
      %p37 = scmp.le.s32.totalorder 1, %s3
      %p38 = scmp.lt.s32.totalorder %s3, 7
      %p39 = pnand %p37, %p38
      %p40 = pneg %p39
      // Predicated region
      $region9: #{custom-call.20} parent=5 // pred_check
        _
      $region10: #{custom-call.20} parent=5 // pred_check_branch
        %42 = sbr.rel (%p39) target = $region12
      $region11: #{custom-call.20} parent=5 // pred_region
        %s43 = ssub.s32 %s3, 1
      $region12: #{custom-call.20} parent=5 // pred_fallthru
        _
      %p44 = scmp.lt.s32.totalorder %s3, 6
      // Predicated region
      $region13: #{custom-call.20} parent=5 // pred_check
        %p45 = pneg %p44
      $region14: #{custom-call.20} parent=5 // pred_check_branch
        %47 = sbr.rel (%p45) target = $region16
      $region15: #{custom-call.20} parent=5 // pred_region
        %s48 = sand.u32 %s3, 1
        %s49 = sand.u32 %s3, 1
        %s50 = smul.addr %s49, 8
        %s51 = scalar_lea.vmem [#allocation0], %s50
        %s52 = sadd.s32 %s13, %s12
        %s53 = sadd.s32 %s52, %s11
        %s54 = sadd.s32 %s53, %s10
        %s55 = smul.addr %s54, 8
        %s56 = scalar_lea.vmem %s0, %s55
        // Predicated region
        $region17: #{custom-call.20} parent=15 // pred_check
          _
        $region18: #{custom-call.20} parent=15 // pred_check_branch
          %58 = sbr.rel (0) target = $region20
        $region19: #{custom-call.20} parent=15 // pred_region
          // Predicated region
          $region21: #{custom-call.20} parent=19 // pred_check
            _
          $region22: #{custom-call.20} parent=19 // pred_check_branch
            %60 = sbr.rel (0) target = $region24
          $region23: #{custom-call.20} parent=19 // pred_region
            // Predicated region
            $region36: #{custom-call.20} parent=23 // pred_check
              _
            $region37: #{custom-call.20} parent=23 // pred_check_branch
              %75 = sbr.rel (0) target = $region39
            $region38: #{custom-call.20} parent=23 // pred_region
              loop: start=0, step=1, limit=1
              $region40: #{custom-call.20} parent=38 // loop_pre_header
                _
              $region41: #{custom-call.20} parent=38 // loop_header
                %s77 = sphi 0, %s81
                %p78 = scmp.ge.s32.totalorder %s77, 1
                %s82 = sphi %s56, %s56
                %s83 = sphi %s51, %s51
              $region42: #{custom-call.20} parent=38 // loop_header_branch
                %80 = sbr.rel (%p78) target = $region46
              $region43: #{custom-call.20} parent=38 // loop_body
                %v84 = vld [vmem:[%s82] sm:$0xff]
                %85 = vst [vmem:[%s83] sm:$0xff] %v84
              $region44: #{custom-call.20} parent=38 // loop_footer
                %s81 = sadd.s32 1, %s77
              $region45: #{custom-call.20} parent=38 // loop_footer_branch
                %76 = sbr.rel target = $region41
              $region46: #{custom-call.20} parent=38 // loop_exit
                _
            $region39: #{custom-call.20} parent=23 // pred_fallthru
              _
            // Predicated region
            $region47: #{custom-call.20} parent=23 // pred_check
              _
            $region48: #{custom-call.20} parent=23 // pred_check_branch
              %87 = sbr.rel target = $region50
            $region49: #{custom-call.20} parent=23 // pred_region
              _
            $region50: #{custom-call.20} parent=23 // pred_fallthru
              _
          $region24: #{custom-call.20} parent=19 // pred_fallthru
            _
          // Predicated region
          $region25: #{custom-call.20} parent=19 // pred_check
            _
          $region26: #{custom-call.20} parent=19 // pred_check_branch
            %62 = sbr.rel target = $region28
          $region27: #{custom-call.20} parent=19 // pred_region
            loop: start=0, step=1, limit=1
            $region29: #{custom-call.20} parent=27 // loop_pre_header
              _
            $region30: #{custom-call.20} parent=27 // loop_header
              %s65 = sphi 0, %s69
              %p66 = scmp.ge.s32.totalorder %s65, 1
              %s70 = sphi %s56, %s56
              %s71 = sphi %s51, %s51
            $region31: #{custom-call.20} parent=27 // loop_header_branch
              %68 = sbr.rel (%p66) target = $region35
            $region32: #{custom-call.20} parent=27 // loop_body
              %v72 = vld [vmem:[%s70] sm:$0xff]
              %73 = vst [vmem:[%s71] sm:$0xff] %v72
            $region33: #{custom-call.20} parent=27 // loop_footer
              %s69 = sadd.s32 1, %s65
            $region34: #{custom-call.20} parent=27 // loop_footer_branch
              %64 = sbr.rel target = $region30
            $region35: #{custom-call.20} parent=27 // loop_exit
              _
          $region28: #{custom-call.20} parent=19 // pred_fallthru
            _
        $region20: #{custom-call.20} parent=15 // pred_fallthru
          _
        %88 = vnop
      $region16: #{custom-call.20} parent=5 // pred_fallthru
        _
      %p89 = scmp.le.s32.totalorder 1, %s3
      %p90 = scmp.lt.s32.totalorder %s3, 7
      %p91 = pnand %p89, %p90
      %p92 = pneg %p91
      // Predicated region
      $region51: #{custom-call.20} parent=5 // pred_check
        _
      $region52: #{custom-call.20} parent=5 // pred_check_branch
        %94 = sbr.rel (%p91) target = $region54
      $region53: #{custom-call.20} parent=5 // pred_region
        #allocation2 [shape = 'f32[8,8]{1,0}', space=vmem, size = 0x1000, scoped, tag = 'rescaled input a']
        %s95 = ssub.s32 %s3, 1
        %s96 = sand.u32 %s8, 1
        %s97 = sand.u32 %s8, 1
        %s98 = smul.addr %s97, 8
        %s99 = scalar_lea.vmem [#allocation0], %s98
        %s100 = sand.u32 %s8, 1
        %s101 = sand.u32 %s8, 1
        %s102 = smul.addr %s101, 8
        %s103 = scalar_lea.vmem [#allocation0], %s102
        %s104 = sand.u32 %s8, 1
        %s105 = sand.u32 %s8, 1
        %s106 = smul.addr %s105, 8
        %s107 = scalar_lea.vmem [#allocation1], %s106
        %v108 = vlaneseq
        %v109 = vand.u32 %v108, 127
        %vm110 = vcmp.lt.s32.totalorder %v109, 8
        %v111 = vlaneseq
        %v112 = vshrl.u32 %v111, 7
        %vm114 = vcmp.eq.s32.totalorder %v112, %v109
        %v115 = vld [vmem:[%s99] sm:$0xff]
        %v116 = vsel %vm114, %v115, 0.0
        %117 = vadd.xlane.f32.xlu0 %v116
        %v118 = vpop.xlane.xlu0 %117
        %vm119 = vcmp.le.s32.totalorder %v112, %v109
        %vm120 = vmand %vm119, %vm110
        %v121 = vsel %vm120, %v115, 0.0
        %v122 = vrcp.pop %v118
        %v123 = vmul.f32 %v121, %v122
        %124 = vst [vmem:[#allocation2] sm:$0xff] %v123
        %v125 = vlaneseq
        %v126 = vand.u32 %v125, 127
        %v127 = vlaneseq
        %v128 = vshrl.u32 %v127, 7
        %vm130 = vcmp.eq.s32.totalorder %v126, %v128
        %v131 = vlaneseq
        %v132 = vand.u32 %v131, 127
        %vm133 = vcmp.eq.s32.totalorder %v132, 7
        %v134 = vsel %vm133, 1.0, -1.0
        %v135 = vsel %vm130, %v134, 0.0
        %s136 = scalar_lea.vmem [#allocation2], 6
        %v137 = vld [vmem:[%s136] ss:$0 sm:$0xff]
        %v138 = vxor.u32 %v137, 2147483648
        %v139 = vlaneseq
        %v140 = vand.u32 %v139, 127
        %vm141 = vcmp.eq.s32.totalorder %v140, 6
        %v142 = vmul.f32 %v138, %v135
        %143 = vadd.xlane.f32.xlu0 %v142
        %v144 = vpop.xlane.xlu0 %143
        %v145 = vsel %vm141, %v144, %v135
        %s146 = scalar_lea.vmem [#allocation2], 5
        %v147 = vld [vmem:[%s146] ss:$0 sm:$0xff]
        %v148 = vxor.u32 %v147, 2147483648
        %v149 = vlaneseq
        %v150 = vand.u32 %v149, 127
        %vm151 = vcmp.eq.s32.totalorder %v150, 5
        %v152 = vmul.f32 %v148, %v145
        %153 = vadd.xlane.f32.xlu0 %v152
        %v154 = vpop.xlane.xlu0 %153
        %v155 = vsel %vm151, %v154, %v145
        %s156 = scalar_lea.vmem [#allocation2], 4
        %v157 = vld [vmem:[%s156] ss:$0 sm:$0xff]
        %v158 = vxor.u32 %v157, 2147483648
        %v159 = vlaneseq
        %v160 = vand.u32 %v159, 127
        %vm161 = vcmp.eq.s32.totalorder %v160, 4
        %v162 = vmul.f32 %v158, %v155
        %163 = vadd.xlane.f32.xlu0 %v162
        %v164 = vpop.xlane.xlu0 %163
        %v165 = vsel %vm161, %v164, %v155
        %s166 = scalar_lea.vmem [#allocation2], 3
        %v167 = vld [vmem:[%s166] ss:$0 sm:$0xff]
        %v168 = vxor.u32 %v167, 2147483648
        %v169 = vlaneseq
        %v170 = vand.u32 %v169, 127
        %vm171 = vcmp.eq.s32.totalorder %v170, 3
        %v172 = vmul.f32 %v168, %v165
        %173 = vadd.xlane.f32.xlu0 %v172
        %v174 = vpop.xlane.xlu0 %173
        %v175 = vsel %vm171, %v174, %v165
        %s176 = scalar_lea.vmem [#allocation2], 2
        %v177 = vld [vmem:[%s176] ss:$0 sm:$0xff]
        %v178 = vxor.u32 %v177, 2147483648
        %v179 = vlaneseq
        %v180 = vand.u32 %v179, 127
        %vm181 = vcmp.eq.s32.totalorder %v180, 2
        %v182 = vmul.f32 %v178, %v175
        %183 = vadd.xlane.f32.xlu0 %v182
        %v184 = vpop.xlane.xlu0 %183
        %v185 = vsel %vm181, %v184, %v175
        %s186 = scalar_lea.vmem [#allocation2], 1
        %v187 = vld [vmem:[%s186] ss:$0 sm:$0xff]
        %v188 = vxor.u32 %v187, 2147483648
        %v189 = vlaneseq
        %v190 = vand.u32 %v189, 127
        %vm191 = vcmp.eq.s32.totalorder %v190, 1
        %v192 = vmul.f32 %v188, %v185
        %193 = vadd.xlane.f32.xlu0 %v192
        %v194 = vpop.xlane.xlu0 %193
        %v195 = vsel %vm191, %v194, %v185
        %v196 = vld [vmem:[#allocation2] ss:$0 sm:$0xff]
        %v197 = vxor.u32 %v196, 2147483648
        %v198 = vlaneseq
        %v199 = vand.u32 %v198, 127
        %vm200 = vcmp.eq.s32.totalorder %v199, 0
        %v201 = vmul.f32 %v197, %v195
        %202 = vadd.xlane.f32.xlu0 %v201
        %v203 = vpop.xlane.xlu0 %202
        %v204 = vsel %vm200, %v203, %v195
        %v205 = vrcp.pop %v118
        %v206 = vmul.f32 %v204, %v205
        %vm207 = vweird.f32 %v118
        %v208 = vsel %vm207, %v204, %v206
        %209 = vst [vmem:[%s107] sm:$0xff] %v208
        %s210 = sand.u32 %s8, 1
        %s211 = sand.u32 %s8, 1
        %s212 = smul.addr %s211, 8
        %s213 = scalar_lea.vmem [#allocation1], %s212
        %s214 = sadd.s32 %s17, %s16
        %s215 = sadd.s32 %s214, %s15
        %s216 = sadd.s32 %s215, %s14
        %s217 = smul.addr %s216, 8
        %s218 = scalar_lea.vmem %s1, %s217
        // Predicated region
        $region55: #{custom-call.20} parent=53 // pred_check
          _
        $region56: #{custom-call.20} parent=53 // pred_check_branch
          %220 = sbr.rel (0) target = $region58
        $region57: #{custom-call.20} parent=53 // pred_region
          // Predicated region
          $region59: #{custom-call.20} parent=57 // pred_check
            _
          $region60: #{custom-call.20} parent=57 // pred_check_branch
            %222 = sbr.rel (0) target = $region62
          $region61: #{custom-call.20} parent=57 // pred_region
            // Predicated region
            $region74: #{custom-call.20} parent=61 // pred_check
              _
            $region75: #{custom-call.20} parent=61 // pred_check_branch
              %237 = sbr.rel (0) target = $region77
            $region76: #{custom-call.20} parent=61 // pred_region
              loop: start=0, step=1, limit=1
              $region78: #{custom-call.20} parent=76 // loop_pre_header
                _
              $region79: #{custom-call.20} parent=76 // loop_header
                %s239 = sphi 0, %s243
                %p240 = scmp.ge.s32.totalorder %s239, 1
                %s244 = sphi %s213, %s213
                %s245 = sphi %s218, %s218
              $region80: #{custom-call.20} parent=76 // loop_header_branch
                %242 = sbr.rel (%p240) target = $region84
              $region81: #{custom-call.20} parent=76 // loop_body
                %v246 = vld [vmem:[%s244] sm:$0xff]
                %247 = vst [vmem:[%s245] sm:$0xff] %v246
              $region82: #{custom-call.20} parent=76 // loop_footer
                %s243 = sadd.s32 1, %s239
              $region83: #{custom-call.20} parent=76 // loop_footer_branch
                %238 = sbr.rel target = $region79
              $region84: #{custom-call.20} parent=76 // loop_exit
                _
            $region77: #{custom-call.20} parent=61 // pred_fallthru
              _
            // Predicated region
            $region85: #{custom-call.20} parent=61 // pred_check
              _
            $region86: #{custom-call.20} parent=61 // pred_check_branch
              %249 = sbr.rel target = $region88
            $region87: #{custom-call.20} parent=61 // pred_region
              _
            $region88: #{custom-call.20} parent=61 // pred_fallthru
              _
          $region62: #{custom-call.20} parent=57 // pred_fallthru
            _
          // Predicated region
          $region63: #{custom-call.20} parent=57 // pred_check
            _
          $region64: #{custom-call.20} parent=57 // pred_check_branch
            %224 = sbr.rel target = $region66
          $region65: #{custom-call.20} parent=57 // pred_region
            loop: start=0, step=1, limit=1
            $region67: #{custom-call.20} parent=65 // loop_pre_header
              _
            $region68: #{custom-call.20} parent=65 // loop_header
              %s227 = sphi 0, %s231
              %p228 = scmp.ge.s32.totalorder %s227, 1
              %s232 = sphi %s213, %s213
              %s233 = sphi %s218, %s218
            $region69: #{custom-call.20} parent=65 // loop_header_branch
              %230 = sbr.rel (%p228) target = $region73
            $region70: #{custom-call.20} parent=65 // loop_body
              %v234 = vld [vmem:[%s232] sm:$0xff]
              %235 = vst [vmem:[%s233] sm:$0xff] %v234
            $region71: #{custom-call.20} parent=65 // loop_footer
              %s231 = sadd.s32 1, %s227
            $region72: #{custom-call.20} parent=65 // loop_footer_branch
              %226 = sbr.rel target = $region68
            $region73: #{custom-call.20} parent=65 // loop_exit
              _
          $region66: #{custom-call.20} parent=57 // pred_fallthru
            _
        $region58: #{custom-call.20} parent=53 // pred_fallthru
          _
        %250 = vnop
      $region54: #{custom-call.20} parent=5 // pred_fallthru
        _
      %p251 = scmp.le.s32.totalorder 2, %s3
      // Predicated region
      $region89: #{custom-call.20} parent=5 // pred_check
        %p252 = pneg %p251
      $region90: #{custom-call.20} parent=5 // pred_check_branch
        %254 = sbr.rel (%p252) target = $region92
      $region91: #{custom-call.20} parent=5 // pred_region
        %s255 = ssub.s32 %s3, 2
        %s256 = sand.u32 %s9, 1
        %s257 = sand.u32 %s9, 1
        %s258 = smul.addr %s257, 8
        %s259 = scalar_lea.vmem [#allocation1], %s258
      $region92: #{custom-call.20} parent=5 // pred_fallthru
        _
    $region6: #{custom-call.20} parent=1 // loop_footer
      %s7 = sadd.s32 1, %s3
    $region7: #{custom-call.20} parent=1 // loop_footer_branch
      %2 = sbr.rel target = $region3
    $region8: #{custom-call.20} parent=1 // loop_exit
      _

// kernel: sub.3
$region0: #{sub.3}
  #allocation0 [shape = 's32[1]{0}', space=sflag, size = 0x4, scoped, tag = 'scoped memory for sub.3']
  %s0 = inlined_call_operand.vmem [shape: f32[6,8], index: 0, kind: input, shape index: {}]
  %s1 = inlined_call_operand.vmem [shape: f32[6,8], index: 1, kind: input, shape index: {}]
  %s2 = inlined_call_operand.vmem [shape: f32[6,8], index: 2, kind: output, shape index: {}]
  %v3 = vld [vmem:[%s0] sm:$0x3f]
  %v4 = vld [vmem:[%s1] sm:$0x3f]
  %5 = xla_tuple %v3, %v4
  %6 = xla_tuple %5
  %v7 = vsub.f32 %v3, %v4
  %8 = xla_tuple %v7
  %9 = vst [vmem:[%s2] sm:$0xff] %v7

// kernel: overlapping_loss.1
$region0: #{overlapping_loss.1}
  #allocation0 [shape = 'u32[]', space=smem, size = 0x4, offset = 0x4, fixed_abs, tag = 'smem constant byte address 0x4 - core index']
  #allocation1 [shape = 'u32[144,128]{1,0:T(1,128)}', space=vmem, size = 0x12000, scoped, tag = 'internal scratch']
  %s0 = inlined_call_operand.vmem [shape: f32[8,8], index: 0, kind: input, shape index: {}]
  %s1 = inlined_call_operand.vmem [shape: f32[8,8,8], index: 1, kind: input, shape index: {}]
  %s2 = inlined_call_operand.vmem [shape: f32[8,1], index: 2, kind: input, shape index: {}]
  %s3 = inlined_call_operand.vmem [shape: f32[8,1], index: 3, kind: input, shape index: {}]
  %s4 = inlined_call_operand.hbm [shape: f32[1,1], index: 4, kind: output, shape index: {}]
  %s5 = sld [smem:[#allocation0]]
  $region30: #{overlapping_loss.1} parent=0
    _
  %s7 = ssub.s32 1, %s5
  %s8 = scalar_select 0, %s7, %s5
  $region1: #{overlapping_loss.1} parent=0
    #allocation2 [shape = 'u8[512]{0}', space=smem, size = 0x200, scoped, tag = 'output window, operand 0, single buffered']
    #allocation3 [shape = 's32[1]{0}', space=sflag, size = 0x4, scoped, tag = 'scoped memory for overlapping_loss.1']
    %9 = vsyncpa [#allocation3], 0
    // Predicated region
    $region2: #{overlapping_loss.1} parent=1 // pred_check
      _
    $region3: #{overlapping_loss.1} parent=1 // pred_check_branch
      %11 = sbr.rel (0) target = $region5
    $region4: #{overlapping_loss.1} parent=1 // pred_region
      _
    $region5: #{overlapping_loss.1} parent=1 // pred_fallthru
      _
    // Predicated region
    $region6: #{overlapping_loss.1} parent=1 // pred_check
      _
    $region7: #{overlapping_loss.1} parent=1 // pred_check_branch
      %13 = sbr.rel (0) target = $region9
    $region8: #{overlapping_loss.1} parent=1 // pred_region
      _
    $region9: #{overlapping_loss.1} parent=1 // pred_fallthru
      _
    // Predicated region
    $region10: #{overlapping_loss.1} parent=1 // pred_check
      _
    $region11: #{overlapping_loss.1} parent=1 // pred_check_branch
      %15 = sbr.rel (0) target = $region13
    $region12: #{overlapping_loss.1} parent=1 // pred_region
      _
    $region13: #{overlapping_loss.1} parent=1 // pred_fallthru
      _
    // Predicated region
    $region14: #{overlapping_loss.1} parent=1 // pred_check
      _
    $region15: #{overlapping_loss.1} parent=1 // pred_check_branch
      %17 = sbr.rel (0) target = $region17
    $region16: #{overlapping_loss.1} parent=1 // pred_region
      _
    $region17: #{overlapping_loss.1} parent=1 // pred_fallthru
      _
    %p18 = scmp.eq.s32.totalorder 0, 0
    // Predicated region
    $region18: #{overlapping_loss.1} parent=1 // pred_check
      %p19 = pneg %p18
    $region19: #{overlapping_loss.1} parent=1 // pred_check_branch
      %21 = sbr.rel (%p19) target = $region21
    $region20: #{overlapping_loss.1} parent=1 // pred_region
      %s22 = scalar_lea.smem [#allocation2], 0
      %23 = sst [smem:[%s22]] 4000.0
    $region21: #{overlapping_loss.1} parent=1 // pred_fallthru
      _
    %v24 = vld [vmem:[%s0] sm:$0xff]
    %v25 = vld [vmem:[%s1] sm:$0xff]
    %v26 = vld [vmem:[%s1 + $0x8] sm:$0xff]
    %v27 = vld [vmem:[%s1 + $0x10] sm:$0xff]
    %v28 = vld [vmem:[%s1 + $0x18] sm:$0xff]
    %v29 = vld [vmem:[%s1 + $0x20] sm:$0xff]
    %v30 = vld [vmem:[%s1 + $0x28] sm:$0xff]
    %v31 = vld [vmem:[%s1 + $0x30] sm:$0xff]
    %v32 = vld [vmem:[%s1 + $0x38] sm:$0xff]
    %v33 = vlaneseq
    %v34 = vshrl.u32 %v33, 7
    %v35 = vsub.s32 0, %v34
    %v36 = vrot.slane %v24, %v35
    %38 = vbcast.lane.b32.xlu0 %v36, 256
    %v39 = vpop.permute.xlu0 %38
    %v40 = vlaneseq
    %v41 = vshrl.u32 %v40, 7
    %v42 = vsub.s32 1, %v41
    %v43 = vrot.slane %v24, %v42
    %45 = vbcast.lane.b32.xlu0 %v43, 256
    %v46 = vpop.permute.xlu0 %45
    %v47 = vlaneseq
    %v48 = vshrl.u32 %v47, 7
    %v49 = vsub.s32 2, %v48
    %v50 = vrot.slane %v24, %v49
    %52 = vbcast.lane.b32.xlu0 %v50, 256
    %v53 = vpop.permute.xlu0 %52
    %v54 = vlaneseq
    %v55 = vshrl.u32 %v54, 7
    %v56 = vsub.s32 3, %v55
    %v57 = vrot.slane %v24, %v56
    %59 = vbcast.lane.b32.xlu0 %v57, 256
    %v60 = vpop.permute.xlu0 %59
    %v61 = vlaneseq
    %v62 = vshrl.u32 %v61, 7
    %v63 = vsub.s32 4, %v62
    %v64 = vrot.slane %v24, %v63
    %66 = vbcast.lane.b32.xlu0 %v64, 256
    %v67 = vpop.permute.xlu0 %66
    %v68 = vlaneseq
    %v69 = vshrl.u32 %v68, 7
    %v70 = vsub.s32 5, %v69
    %v71 = vrot.slane %v24, %v70
    %73 = vbcast.lane.b32.xlu0 %v71, 256
    %v74 = vpop.permute.xlu0 %73
    %v75 = vlaneseq
    %v76 = vshrl.u32 %v75, 7
    %v77 = vsub.s32 6, %v76
    %v78 = vrot.slane %v24, %v77
    %80 = vbcast.lane.b32.xlu0 %v78, 256
    %v81 = vpop.permute.xlu0 %80
    %v82 = vlaneseq
    %v83 = vshrl.u32 %v82, 7
    %v84 = vsub.s32 7, %v83
    %v85 = vrot.slane %v24, %v84
    %87 = vbcast.lane.b32.xlu0 %v85, 256
    %v88 = vpop.permute.xlu0 %87
    %v89 = vmul.f32 %v39, %v25
    %v90 = vmul.f32 %v46, %v26
    %v91 = vmul.f32 %v53, %v27
    %v92 = vmul.f32 %v60, %v28
    %v93 = vmul.f32 %v67, %v29
    %v94 = vmul.f32 %v74, %v30
    %v95 = vmul.f32 %v81, %v31
    %v96 = vmul.f32 %v88, %v32
    %vm97 = vcmask 64512
    %v98 = vsel %vm97, %v89, 0.0
    %v99 = vrot.slane %v98, 4
    %v100 = vadd.f32 %v98, %v99
    %v101 = vrot.slane %v100, 2
    %v102 = vadd.f32 %v100, %v101
    %v103 = vrot.slane %v102, 1
    %v104 = vadd.f32 %v102, %v103
    %v105 = vsel %vm97, %v90, 0.0
    %v106 = vrot.slane %v105, 4
    %v107 = vadd.f32 %v105, %v106
    %v108 = vrot.slane %v107, 2
    %v109 = vadd.f32 %v107, %v108
    %v110 = vrot.slane %v109, 1
    %v111 = vadd.f32 %v109, %v110
    %v112 = vsel %vm97, %v91, 0.0
    %v113 = vrot.slane %v112, 4
    %v114 = vadd.f32 %v112, %v113
    %v115 = vrot.slane %v114, 2
    %v116 = vadd.f32 %v114, %v115
    %v117 = vrot.slane %v116, 1
    %v118 = vadd.f32 %v116, %v117
    %v119 = vsel %vm97, %v92, 0.0
    %v120 = vrot.slane %v119, 4
    %v121 = vadd.f32 %v119, %v120
    %v122 = vrot.slane %v121, 2
    %v123 = vadd.f32 %v121, %v122
    %v124 = vrot.slane %v123, 1
    %v125 = vadd.f32 %v123, %v124
    %v126 = vsel %vm97, %v93, 0.0
    %v127 = vrot.slane %v126, 4
    %v128 = vadd.f32 %v126, %v127
    %v129 = vrot.slane %v128, 2
    %v130 = vadd.f32 %v128, %v129
    %v131 = vrot.slane %v130, 1
    %v132 = vadd.f32 %v130, %v131
    %v133 = vsel %vm97, %v94, 0.0
    %v134 = vrot.slane %v133, 4
    %v135 = vadd.f32 %v133, %v134
    %v136 = vrot.slane %v135, 2
    %v137 = vadd.f32 %v135, %v136
    %v138 = vrot.slane %v137, 1
    %v139 = vadd.f32 %v137, %v138
    %v140 = vsel %vm97, %v95, 0.0
    %v141 = vrot.slane %v140, 4
    %v142 = vadd.f32 %v140, %v141
    %v143 = vrot.slane %v142, 2
    %v144 = vadd.f32 %v142, %v143
    %v145 = vrot.slane %v144, 1
    %v146 = vadd.f32 %v144, %v145
    %v147 = vsel %vm97, %v96, 0.0
    %v148 = vrot.slane %v147, 4
    %v149 = vadd.f32 %v147, %v148
    %v150 = vrot.slane %v149, 2
    %v151 = vadd.f32 %v149, %v150
    %v152 = vrot.slane %v151, 1
    %v153 = vadd.f32 %v151, %v152
    %v155 = vrot.slane %v24, 1
    %v156 = vrot.slane %v24, 2
    %v157 = vrot.slane %v24, 3
    %v158 = vrot.slane %v24, 4
    %v159 = vrot.slane %v24, 5
    %v160 = vrot.slane %v24, 6
    %v161 = vrot.slane %v24, 7
    %v170 = vmul.f32 %v104, %v24
    %v171 = vmul.f32 %v111, %v155
    %v172 = vmul.f32 %v118, %v156
    %v173 = vmul.f32 %v125, %v157
    %v174 = vmul.f32 %v132, %v158
    %v175 = vmul.f32 %v139, %v159
    %v176 = vmul.f32 %v146, %v160
    %v177 = vmul.f32 %v153, %v161
    %v186 = vrot.slane %v171, 7
    %vm187 = vcmask 1041409
    %v188 = vsel %vm187, %v186, %v170
    %v189 = vrot.slane %v172, 6
    %vm190 = vcmask 1042434
    %v191 = vsel %vm190, %v189, %v188
    %v192 = vrot.slane %v173, 5
    %vm193 = vcmask 1043459
    %v194 = vsel %vm193, %v192, %v191
    %v195 = vrot.slane %v174, 4
    %vm196 = vcmask 1044484
    %v197 = vsel %vm196, %v195, %v194
    %v198 = vrot.slane %v175, 3
    %vm199 = vcmask 1045509
    %v200 = vsel %vm199, %v198, %v197
    %v201 = vrot.slane %v176, 2
    %vm202 = vcmask 1046534
    %v203 = vsel %vm202, %v201, %v200
    %v204 = vrot.slane %v177, 1
    %vm205 = vcmask 1047559
    %v206 = vsel %vm205, %v204, %v203
    %v208 = vsel %vm97, %v206, 0.0
    %209 = vadd.xlane.f32.xlu0 %v208
    %v210 = vpop.xlane.xlu0 %209
    %v211 = vmul.f32 %v210, 0.125
    %v212 = vld [vmem:[%s2] sm:$0xff]
    %v213 = vadd.f32 %v211, %v212
    %v214 = vmax.f32 %v213, 0.001
    %v215 = vld [vmem:[%s3] sm:$0xff]
    %v216 = vrcp.pop %v214
    %v217 = vmul.f32 %v215, %v216
    %vm218 = vcmask 7168
    %v219 = vsel %vm218, %v217, 0.0
    %220 = vadd.xlane.f32.xlu0 %v219
    %v221 = vpop.xlane.xlu0 %220
    %v222 = vrot.slane %v221, 4
    %v223 = vadd.f32 %v221, %v222
    %v224 = vrot.slane %v223, 2
    %v225 = vadd.f32 %v223, %v224
    %v226 = vrot.slane %v225, 1
    %v227 = vadd.f32 %v225, %v226
    %s228 = vtos %v227
    %s229 = sld [smem:[#allocation2]]
    %s230 = sadd.f32 %s229, %s228
    %s231 = scalar_lea.smem [#allocation2], 0
    %232 = sst [smem:[%s231]] %s230
    // Predicated region
    $region22: #{overlapping_loss.1} parent=1 // pred_check
      _
    $region23: #{overlapping_loss.1} parent=1 // pred_check_branch
      %234 = sbr.rel (0) target = $region25
    $region24: #{overlapping_loss.1} parent=1 // pred_region
      %s236 = ssub.s32 16, 16
      %237 = vsyncadd [#allocation3], %s236
      %240 = dma.smem_to_hbm [#allocation2], 16, %s4, [#allocation3]
    $region25: #{overlapping_loss.1} parent=1 // pred_fallthru
      _
    // Predicated region
    $region26: #{overlapping_loss.1} parent=1 // pred_check
      _
    $region27: #{overlapping_loss.1} parent=1 // pred_check_branch
      %242 = sbr.rel (0) target = $region29
    $region28: #{overlapping_loss.1} parent=1 // pred_region
      %243 = dma.done [#allocation3], 16
    $region29: #{overlapping_loss.1} parent=1 // pred_fallthru
      _
    %244 = sfence
    %245 = vsyncpa [#allocation3], 1

</llo_original>
